<compile_context>
chip_gen: v6e
topology: v6e:2x2x1
jax: 0.10.0
libtpu: 0.0.40
codegen_flags: <defaults>
</compile_context>

<pallas_src>
import functools

import jax
import jax.numpy as jnp
import numpy as np
from jax.experimental import pallas as pl
from jax.experimental.pallas import tpu as pltpu

_LN_EPS = 1e-5  # torch nn.LayerNorm default


def _gelu(x):
    # TODO(synk): torch nn.GELU defaults to the exact erf formulation; the tanh
    # approximation is used here for guaranteed Mosaic (EUP) lowering.
    return jax.nn.gelu(x, approximate=True)


def _layernorm(x, g, b):
    mu = jnp.mean(x, axis=-1, keepdims=True)
    xc = x - mu
    var = jnp.mean(xc * xc, axis=-1, keepdims=True)
    return xc * jax.lax.rsqrt(var + _LN_EPS) * g + b


# ----------------------------------------------------------------------------
# Pallas kernel: mixer trunk (depth blocks + final LayerNorm), grid over depth.
# ----------------------------------------------------------------------------
def _mixer_kernel(h0_ref,
                  ln1_g_ref, ln1_b_ref, wt1_ref, bt1_ref, wt2_ref, bt2_ref,
                  ln2_g_ref, ln2_b_ref, wc1_ref, bc1_ref, wc2_ref, bc2_ref,
                  lnf_g_ref, lnf_b_ref,
                  act_ref, *, B, S):
    d = pl.program_id(0)
    H = act_ref.shape[-1]
    bf16 = jnp.bfloat16

    # ---- grid step 0: load the projected activation into the resident block
    @pl.when(d == 0)
    def _():
        act_ref[...] = h0_ref[...]

    x = act_ref[...]                                            # (B*S, H) f32

    # ---- token mixing: LN -> Conv1d(S, S*ef, 1) -> GELU -> Conv1d(S*ef, S, 1) + res
    xn = _layernorm(x, ln1_g_ref[d], ln1_b_ref[d]).astype(bf16)  # (B*S, H)
    # (B*S, H) -> (S, B*H): lane-concat of per-batch (S, H) slabs (S rows /
    # H lanes are tile-aligned, so these slices/concats are vreg renamings).
    xn_tok = jnp.concatenate(
        [xn[b * S:(b + 1) * S, :] for b in range(B)], axis=1)   # (S, B*H) bf16
    t = jnp.dot(wt1_ref[d], xn_tok,
                preferred_element_type=jnp.float32)             # (Sef, B*H) f32
    t = _gelu((t + bt1_ref[d]).astype(bf16))                    # bf16 epilogue
    y_tok = jnp.dot(wt2_ref[d], t,
                    preferred_element_type=jnp.float32)         # (S, B*H) f32
    y_tok = y_tok + bt2_ref[d]
    # (S, B*H) -> (B*S, H): sublane-concat of per-batch lane slabs.
    y = jnp.concatenate(
        [y_tok[:, b * H:(b + 1) * H] for b in range(B)], axis=0)  # (B*S, H)
    x = x + y

    # ---- channel mixing: LN -> Linear(H, H*ef) -> GELU -> Linear(H*ef, H) + res
    xn = _layernorm(x, ln2_g_ref[d], ln2_b_ref[d]).astype(bf16)  # (B*S, H)
    h = jnp.dot(xn, wc1_ref[...],
                preferred_element_type=jnp.float32) + bc1_ref[d]  # (B*S, Hef) f32
    h = _gelu(h.astype(bf16))                                     # bf16 epilogue
    y = jnp.dot(h, wc2_ref[...],
                preferred_element_type=jnp.float32) + bc2_ref[d]  # (B*S, H) f32
    x = x + y
    act_ref[...] = x

    # ---- last grid step: fuse the final LayerNorm into the kernel ----
    @pl.when(d == pl.num_programs(0) - 1)
    def _():
        act_ref[...] = _layernorm(x, lnf_g_ref[...], lnf_b_ref[...])


def mlp_mixer_pallas(params, x):
    B, S, Kin = x.shape
    depth = params["ln1_g"].shape[0]
    H = params["ln1_g"].shape[-1]

    # One-shot input projection stays in plain XLA (perf review: keeping
    # x/w_in resident across all depth steps is dead VMEM).
    h0 = jnp.einsum("bsk,kh->bsh", x, params["w_in"],
                    preferred_element_type=jnp.float32) + params["b_in"]
    h0 = h0.reshape(B * S, H)                                   # b-major rows

    # bf16 weight streaming / resident storage for matmul operands (f32
    # accumulation inside the kernel).  LN params / biases / residual stay f32.
    bf = lambda a: a.astype(jnp.bfloat16)
    wt1, wt2 = bf(params["wt1"]), bf(params["wt2"])
    wc1, wc2 = bf(params["wc1"]), bf(params["wc2"])

    def full(a):   # whole-array resident block, DMA'd once, indexed with d in-kernel
        nd = a.ndim

        def imap(d):
            return (0,) * nd

        return pl.BlockSpec(a.shape, imap)

    def stream(a):  # per-depth streamed block (depth dim squeezed)
        return pl.BlockSpec((None,) + a.shape[1:], lambda d: (d, 0, 0))

    in_specs = [
        full(h0),                                   # projected activation
        full(params["ln1_g"]), full(params["ln1_b"]),
        full(wt1), full(params["bt1"]),
        full(wt2), full(params["bt2"]),
        full(params["ln2_g"]), full(params["ln2_b"]),
        stream(wc1), full(params["bc1"]),
        stream(wc2), full(params["bc2"]),
        full(params["lnf_g"]), full(params["lnf_b"]),
    ]
    out_spec = pl.BlockSpec((B * S, H), lambda d: (0, 0))

    kernel = functools.partial(_mixer_kernel, B=B, S=S)
    h_out = pl.pallas_call(
        kernel,
        out_shape=jax.ShapeDtypeStruct((B * S, H), jnp.float32),
        grid_spec=pltpu.PrefetchScalarGridSpec(
            num_scalar_prefetch=0,
            grid=(depth,),
            in_specs=in_specs,
            out_specs=out_spec,
        ),
        compiler_params=pltpu.CompilerParams(
            dimension_semantics=("arbitrary",),
            vmem_limit_bytes=40 * 1024 * 1024),
    )(h0,
      params["ln1_g"], params["ln1_b"], wt1, params["bt1"],
      wt2, params["bt2"], params["ln2_g"], params["ln2_b"],
      wc1, params["bc1"], wc2, params["bc2"],
      params["lnf_g"], params["lnf_b"])

    # One-shot tail: mean over particles + output head in plain XLA.
    xm = jnp.mean(h_out.reshape(B, S, H), axis=1)               # (B, H)
    return jnp.dot(xm, params["w_head"],
                   preferred_element_type=jnp.float32) + params["b_head"]


# ----------------------------------------------------------------------------
# Glue: 3D sin/cos positional embedding + concat (tiny, elementwise; plain JAX)
# ----------------------------------------------------------------------------
def get_3d_positional_embedding(xyz, embedding_size=64):
    B, N, D = xyz.shape
    assert D == 3
    div = jnp.arange(0, embedding_size, 2, dtype=jnp.float32) * (1000.0 / embedding_size)

    def pe(coord):                                   # coord: (B, N, 1)
        ang = coord * div                            # (B, N, E/2)
        return jnp.stack([jnp.sin(ang), jnp.cos(ang)], axis=-1).reshape(B, N, embedding_size)

    pex = pe(xyz[:, :, 0:1])
    pey = pe(xyz[:, :, 1:2])
    pez = pe(xyz[:, :, 2:3])
    # cat_coordinates=True
    return jnp.concatenate([xyz, pex, pey, pez], axis=2)


def delta_block_forward(params, features, correlations, flows, *, input_dim, S, pe_dim=64):
    B, S_, D = flows.shape
    assert D == 3 and S_ == S
    flow_sincos = get_3d_positional_embedding(flows, pe_dim)
    x = jnp.concatenate([features, correlations, flow_sincos], axis=2)
    delta = mlp_mixer_pallas(params, x)              # (B, S*(input_dim+2))
    return delta.reshape(B, S, input_dim + 2)


# ----------------------------------------------------------------------------
# Deterministic parameter init (synthetic; shapes follow DeltaBlock.__init__)
# ----------------------------------------------------------------------------
def init_delta_block_params(key, *, input_dim, corr_levels, corr_radius, S,
                            mixer_hidden, depth, expansion=4, pe_dim=64):
    kitchen = corr_levels * (2 * corr_radius + 1) ** 2 + input_dim + pe_dim * 3 + 3
    H, Hef, Sef = mixer_hidden, mixer_hidden * expansion, S * expansion
    Dout = S * (input_dim + 2)
    keys = iter(jax.random.split(key, 40))

    def w(shape, fan_in):
        return jax.random.normal(next(keys), shape, jnp.float32) / np.sqrt(fan_in)

    def bias(shape):
        return 0.01 * jax.random.normal(next(keys), shape, jnp.float32)

    def gamma(shape):
        return 1.0 + 0.1 * jax.random.normal(next(keys), shape, jnp.float32)

    params = dict(
        w_in=w((kitchen, H), kitchen), b_in=bias((1, H)),
        ln1_g=gamma((depth, 1, H)), ln1_b=bias((depth, 1, H)),
        wt1=w((depth, Sef, S), S), bt1=bias((depth, Sef, 1)),
        wt2=w((depth, S, Sef), Sef), bt2=bias((depth, S, 1)),
        ln2_g=gamma((depth, 1, H)), ln2_b=bias((depth, 1, H)),
        wc1=w((depth, H, Hef), H), bc1=bias((depth, 1, Hef)),
        wc2=w((depth, Hef, H), Hef), bc2=bias((depth, 1, H)),
        lnf_g=gamma((1, H)), lnf_b=bias((1, H)),
        w_head=w((H, Dout), H), b_head=bias((1, Dout)),
    )
    return params, kitchen


# ----------------------------------------------------------------------------
# Pure-JAX reference mirroring the kernel's numerical scheme (bf16 matmul
# operands + bf16 GELU epilogues, f32 accumulation / LN / residual), to
# isolate kernel-structure correctness from bf16 quantization drift.
# ----------------------------------------------------------------------------
def mlp_mixer_ref(params, x):
    depth = params["ln1_g"].shape[0]
    bf = jnp.bfloat16
    h = jnp.einsum("bsk,kh->bsh", x, params["w_in"],
                   preferred_element_type=jnp.float32) + params["b_in"]
    for d in range(depth):
        xn = _layernorm(h, params["ln1_g"][d], params["ln1_b"][d])
        t = jnp.einsum("os,bsh->boh", params["wt1"][d].astype(bf), xn.astype(bf),
                       preferred_element_type=jnp.float32) + params["bt1"][d][None]
        t = _gelu(t.astype(bf))
        h = h + (jnp.einsum("so,boh->bsh", params["wt2"][d].astype(bf), t,
                            preferred_element_type=jnp.float32)
                 + params["bt2"][d][None])
        xn = _layernorm(h, params["ln2_g"][d], params["ln2_b"][d])
        c = jnp.einsum("bsh,hf->bsf", xn.astype(bf), params["wc1"][d].astype(bf),
                       preferred_element_type=jnp.float32) + params["bc1"][d][None]
        c = _gelu(c.astype(bf))
        h = h + (jnp.einsum("bsf,fh->bsh", c, params["wc2"][d].astype(bf),
                            preferred_element_type=jnp.float32)
                 + params["bc2"][d][None])
    xf = _layernorm(h, params["lnf_g"], params["lnf_b"])
    xm = jnp.mean(xf, axis=1)
    return jnp.dot(xm, params["w_head"],
                   preferred_element_type=jnp.float32) + params["b_head"]


if __name__ == "__main__":
    # Small config consistent with the module's forward (defaults in the real
    # model are input_dim=128, corr_levels=4, corr_radius=3, S=8, hidden=512, depth=12).
    B, S = 2, 8
    input_dim = 32
    corr_levels, corr_radius = 2, 1
    mixer_hidden, depth, expansion = 128, 3, 4
    pe_dim = 64
    corr_dim = corr_levels * (2 * corr_radius + 1) ** 2

    key = jax.random.PRNGKey(0)
    kp, kf, kc, kl = jax.random.split(key, 4)
    params, kitchen = init_delta_block_params(
        kp, input_dim=input_dim, corr_levels=corr_levels, corr_radius=corr_radius,
        S=S, mixer_hidden=mixer_hidden, depth=depth, expansion=expansion, pe_dim=pe_dim)

    features = jax.random.normal(kf, (B, S, input_dim), jnp.float32)
    correlations = jax.random.normal(kc, (B, S, corr_dim), jnp.float32)
    flows = jax.random.normal(kl, (B, S, 3), jnp.float32)

    delta = delta_block_forward(params, features, correlations, flows,
                                input_dim=input_dim, S=S, pe_dim=pe_dim)
    delta = jax.block_until_ready(delta)
    assert delta.shape == (B, S, input_dim + 2), delta.shape

    # sanity check against a pure-JAX reference of the same math (bf16 matmul
    # operands + bf16 GELU, f32 accumulation — matching the kernel's scheme).
    flow_sincos = get_3d_positional_embedding(flows, pe_dim)
    x_full = jnp.concatenate([features, correlations, flow_sincos], axis=2)
    assert x_full.shape[-1] == kitchen
    ref = mlp_mixer_ref(params, x_full).reshape(B, S, input_dim + 2)
    err = float(jnp.max(jnp.abs(delta - ref)))
    # tolerance covers Mosaic-vs-XLA bf16 GELU/tanh rounding differences
    assert err < 2e-2, f"kernel/reference mismatch: max abs err = {err}"

    print("KERNEL_OK")
</pallas_src>

<mosaic_0001>
module attributes {stable_mosaic.version = 11 : i64} {
  func.func @_mixer_kernel(%arg0: i32, %arg1: memref<16x128xf32, #tpu.memory_space<vmem>>, %arg2: memref<3x1x128xf32, #tpu.memory_space<vmem>>, %arg3: memref<3x1x128xf32, #tpu.memory_space<vmem>>, %arg4: memref<3x32x8xbf16, #tpu.memory_space<vmem>>, %arg5: memref<3x32x1xf32, #tpu.memory_space<vmem>>, %arg6: memref<3x8x32xbf16, #tpu.memory_space<vmem>>, %arg7: memref<3x8x1xf32, #tpu.memory_space<vmem>>, %arg8: memref<3x1x128xf32, #tpu.memory_space<vmem>>, %arg9: memref<3x1x128xf32, #tpu.memory_space<vmem>>, %arg10: memref<1x128x512xbf16, #tpu.memory_space<vmem>>, %arg11: memref<3x1x512xf32, #tpu.memory_space<vmem>>, %arg12: memref<1x512x128xbf16, #tpu.memory_space<vmem>>, %arg13: memref<3x1x128xf32, #tpu.memory_space<vmem>>, %arg14: memref<1x128xf32, #tpu.memory_space<vmem>>, %arg15: memref<1x128xf32, #tpu.memory_space<vmem>>, %arg16: memref<16x128xf32, #tpu.memory_space<vmem>>) attributes {dimension_semantics = [#tpu.dimension_semantics<arbitrary>], iteration_bounds = array<i64: 3>, scalar_prefetch = 0 : i64, scratch_operands = 0 : i64, tpu.core_type = #tpu.core_type<tc>, window_params = [{pipeline_mode = #tpu.pipeline_mode<synchronous>, transform_indices = @transform_0, window_bounds = array<i64: 16, 128>}, {pipeline_mode = #tpu.pipeline_mode<synchronous>, transform_indices = @transform_1, window_bounds = array<i64: 3, 1, 128>}, {pipeline_mode = #tpu.pipeline_mode<synchronous>, transform_indices = @transform_2, window_bounds = array<i64: 3, 1, 128>}, {pipeline_mode = #tpu.pipeline_mode<synchronous>, transform_indices = @transform_3, window_bounds = array<i64: 3, 32, 8>}, {pipeline_mode = #tpu.pipeline_mode<synchronous>, transform_indices = @transform_4, window_bounds = array<i64: 3, 32, 1>}, {pipeline_mode = #tpu.pipeline_mode<synchronous>, transform_indices = @transform_5, window_bounds = array<i64: 3, 8, 32>}, {pipeline_mode = #tpu.pipeline_mode<synchronous>, transform_indices = @transform_6, window_bounds = array<i64: 3, 8, 1>}, {pipeline_mode = #tpu.pipeline_mode<synchronous>, transform_indices = @transform_7, window_bounds = array<i64: 3, 1, 128>}, {pipeline_mode = #tpu.pipeline_mode<synchronous>, transform_indices = @transform_8, window_bounds = array<i64: 3, 1, 128>}, {transform_indices = @transform_9, window_bounds = array<i64: 1, 128, 512>}, {pipeline_mode = #tpu.pipeline_mode<synchronous>, transform_indices = @transform_10, window_bounds = array<i64: 3, 1, 512>}, {transform_indices = @transform_11, window_bounds = array<i64: 1, 512, 128>}, {pipeline_mode = #tpu.pipeline_mode<synchronous>, transform_indices = @transform_12, window_bounds = array<i64: 3, 1, 128>}, {pipeline_mode = #tpu.pipeline_mode<synchronous>, transform_indices = @transform_13, window_bounds = array<i64: 1, 128>}, {pipeline_mode = #tpu.pipeline_mode<synchronous>, transform_indices = @transform_14, window_bounds = array<i64: 1, 128>}, {pipeline_mode = #tpu.pipeline_mode<synchronous>, transform_indices = @transform_15, window_bounds = array<i64: 16, 128>}]} {
    %c0_i32 = arith.constant 0 : i32
    %0 = arith.cmpi eq, %arg0, %c0_i32 : i32
    %1 = arith.extui %0 : i1 to i32
    %c0_i32_0 = arith.constant 0 : i32
    %2 = arith.cmpi ne, %1, %c0_i32_0 : i32
    scf.if %2 {
      %c0_52 = arith.constant 0 : index
      %c0_53 = arith.constant 0 : index
      %132 = vector.load %arg1[%c0_52, %c0_53] : memref<16x128xf32, #tpu.memory_space<vmem>>, vector<16x128xf32>
      %c0_54 = arith.constant 0 : index
      %c0_55 = arith.constant 0 : index
      %133 = vector.load %arg16[%c0_54, %c0_55] : memref<16x128xf32, #tpu.memory_space<vmem>>, vector<16x128xf32>
      tpu.vector_store %arg16[%c0_54, %c0_55], %132 {strides = array<i32>} : memref<16x128xf32, #tpu.memory_space<vmem>>, vector<16x128xf32>,
    } else {
    }
    %c0 = arith.constant 0 : index
    %c0_1 = arith.constant 0 : index
    %3 = vector.load %arg16[%c0, %c0_1] : memref<16x128xf32, #tpu.memory_space<vmem>>, vector<16x128xf32>
    %4 = arith.index_cast %arg0 : i32 to index
    %c0_2 = arith.constant 0 : index
    %c0_3 = arith.constant 0 : index
    %5 = vector.load %arg2[%4, %c0_2, %c0_3] : memref<3x1x128xf32, #tpu.memory_space<vmem>>, vector<1x1x128xf32>
    %6 = vector.shape_cast %5 : vector<1x1x128xf32> to vector<1x128xf32>
    %7 = arith.index_cast %arg0 : i32 to index
    %c0_4 = arith.constant 0 : index
    %c0_5 = arith.constant 0 : index
    %8 = vector.load %arg3[%7, %c0_4, %c0_5] : memref<3x1x128xf32, #tpu.memory_space<vmem>>, vector<1x1x128xf32>
    %9 = vector.shape_cast %8 : vector<1x1x128xf32> to vector<1x128xf32>
    %cst = arith.constant dense<0.000000e+00> : vector<16xf32>
    %10 = vector.multi_reduction <add>, %3, %cst [1] : vector<16x128xf32> to vector<16xf32>
    %11 = vector.shape_cast %10 : vector<16xf32> to vector<16x1xf32>
    %cst_6 = arith.constant 1.280000e+02 : f32
    %12 = vector.broadcast %cst_6 : f32 to vector<16x1xf32>
    %13 = arith.divf %11, %12 : vector<16x1xf32>
    %14 = vector.broadcast %13 : vector<16x1xf32> to vector<16x128xf32>
    %15 = arith.subf %3, %14 : vector<16x128xf32>
    %16 = arith.mulf %15, %15 : vector<16x128xf32>
    %cst_7 = arith.constant dense<0.000000e+00> : vector<16xf32>
    %17 = vector.multi_reduction <add>, %16, %cst_7 [1] : vector<16x128xf32> to vector<16xf32>
    %18 = vector.shape_cast %17 : vector<16xf32> to vector<16x1xf32>
    %cst_8 = arith.constant 1.280000e+02 : f32
    %19 = vector.broadcast %cst_8 : f32 to vector<16x1xf32>
    %20 = arith.divf %18, %19 : vector<16x1xf32>
    %cst_9 = arith.constant 9.99999974E-6 : f32
    %21 = vector.broadcast %cst_9 : f32 to vector<16x1xf32>
    %22 = arith.addf %20, %21 : vector<16x1xf32>
    %23 = math.rsqrt %22 : vector<16x1xf32>
    %24 = vector.broadcast %23 : vector<16x1xf32> to vector<16x128xf32>
    %25 = arith.mulf %15, %24 : vector<16x128xf32>
    %26 = vector.broadcast %6 : vector<1x128xf32> to vector<16x128xf32>
    %27 = arith.mulf %25, %26 : vector<16x128xf32>
    %28 = vector.broadcast %9 : vector<1x128xf32> to vector<16x128xf32>
    %29 = arith.addf %27, %28 : vector<16x128xf32>
    %30 = arith.truncf %29 : vector<16x128xf32> to vector<16x128xbf16>
    %31 = vector.extract_strided_slice %30 {offsets = [0, 0], sizes = [8, 128], strides = [1, 1]} : vector<16x128xbf16> to vector<8x128xbf16>
    %32 = vector.extract_strided_slice %30 {offsets = [8, 0], sizes = [8, 128], strides = [1, 1]} : vector<16x128xbf16> to vector<8x128xbf16>
    %33 = tpu.concatenate %31, %32 in 1 : vector<8x128xbf16>, vector<8x128xbf16> -> vector<8x256xbf16>
    %34 = arith.index_cast %arg0 : i32 to index
    %c0_10 = arith.constant 0 : index
    %c0_11 = arith.constant 0 : index
    %35 = vector.load %arg4[%34, %c0_10, %c0_11] : memref<3x32x8xbf16, #tpu.memory_space<vmem>>, vector<1x32x8xbf16>
    %36 = vector.shape_cast %35 : vector<1x32x8xbf16> to vector<32x8xbf16>
    %cst_12 = arith.constant dense<0.000000e+00> : vector<32x256xf32>
    %37 = tpu.matmul %36, %33, %cst_12 {dimension_numbers = #tpu.dot_dimension_numbers<[1], [0], [0], [1], [0, 0, 1, 1], [], []>} : vector<32x8xbf16>, vector<8x256xbf16>, vector<32x256xf32> -> vector<32x256xf32>
    %38 = arith.index_cast %arg0 : i32 to index
    %c0_13 = arith.constant 0 : index
    %c0_14 = arith.constant 0 : index
    %39 = vector.load %arg5[%38, %c0_13, %c0_14] : memref<3x32x1xf32, #tpu.memory_space<vmem>>, vector<1x32x1xf32>
    %40 = vector.shape_cast %39 : vector<1x32x1xf32> to vector<32x1xf32>
    %41 = vector.broadcast %40 : vector<32x1xf32> to vector<32x256xf32>
    %42 = arith.addf %37, %41 : vector<32x256xf32>
    %43 = arith.truncf %42 : vector<32x256xf32> to vector<32x256xbf16>
    %44 = arith.mulf %43, %43 : vector<32x256xbf16>
    %45 = arith.mulf %43, %44 : vector<32x256xbf16>
    %cst_15 = arith.constant 4.467770e-02 : bf16
    %46 = vector.broadcast %cst_15 : bf16 to vector<32x256xbf16>
    %47 = arith.mulf %46, %45 : vector<32x256xbf16>
    %48 = arith.addf %43, %47 : vector<32x256xbf16>
    %cst_16 = arith.constant 7.968750e-01 : bf16
    %49 = vector.broadcast %cst_16 : bf16 to vector<32x256xbf16>
    %50 = arith.mulf %49, %48 : vector<32x256xbf16>
    %51 = math.tanh %50 : vector<32x256xbf16>
    %cst_17 = arith.constant 1.000000e+00 : bf16
    %52 = vector.broadcast %cst_17 : bf16 to vector<32x256xbf16>
    %53 = arith.addf %52, %51 : vector<32x256xbf16>
    %cst_18 = arith.constant 5.000000e-01 : bf16
    %54 = vector.broadcast %cst_18 : bf16 to vector<32x256xbf16>
    %55 = arith.mulf %54, %53 : vector<32x256xbf16>
    %56 = arith.mulf %43, %55 : vector<32x256xbf16>
    %57 = arith.index_cast %arg0 : i32 to index
    %c0_19 = arith.constant 0 : index
    %c0_20 = arith.constant 0 : index
    %58 = vector.load %arg6[%57, %c0_19, %c0_20] : memref<3x8x32xbf16, #tpu.memory_space<vmem>>, vector<1x8x32xbf16>
    %59 = vector.shape_cast %58 : vector<1x8x32xbf16> to vector<8x32xbf16>
    %cst_21 = arith.constant dense<0.000000e+00> : vector<8x256xf32>
    %60 = tpu.matmul %59, %56, %cst_21 {dimension_numbers = #tpu.dot_dimension_numbers<[1], [0], [0], [1], [0, 0, 1, 1], [], []>} : vector<8x32xbf16>, vector<32x256xbf16>, vector<8x256xf32> -> vector<8x256xf32>
    %61 = arith.index_cast %arg0 : i32 to index
    %c0_22 = arith.constant 0 : index
    %c0_23 = arith.constant 0 : index
    %62 = vector.load %arg7[%61, %c0_22, %c0_23] : memref<3x8x1xf32, #tpu.memory_space<vmem>>, vector<1x8x1xf32>
    %63 = vector.shape_cast %62 : vector<1x8x1xf32> to vector<8x1xf32>
    %64 = vector.broadcast %63 : vector<8x1xf32> to vector<8x256xf32>
    %65 = arith.addf %60, %64 : vector<8x256xf32>
    %66 = vector.extract_strided_slice %65 {offsets = [0, 0], sizes = [8, 128], strides = [1, 1]} : vector<8x256xf32> to vector<8x128xf32>
    %67 = vector.extract_strided_slice %65 {offsets = [0, 128], sizes = [8, 128], strides = [1, 1]} : vector<8x256xf32> to vector<8x128xf32>
    %68 = tpu.concatenate %66, %67 in 0 : vector<8x128xf32>, vector<8x128xf32> -> vector<16x128xf32>
    %69 = arith.addf %3, %68 : vector<16x128xf32>
    %70 = arith.index_cast %arg0 : i32 to index
    %c0_24 = arith.constant 0 : index
    %c0_25 = arith.constant 0 : index
    %71 = vector.load %arg8[%70, %c0_24, %c0_25] : memref<3x1x128xf32, #tpu.memory_space<vmem>>, vector<1x1x128xf32>
    %72 = vector.shape_cast %71 : vector<1x1x128xf32> to vector<1x128xf32>
    %73 = arith.index_cast %arg0 : i32 to index
    %c0_26 = arith.constant 0 : index
    %c0_27 = arith.constant 0 : index
    %74 = vector.load %arg9[%73, %c0_26, %c0_27] : memref<3x1x128xf32, #tpu.memory_space<vmem>>, vector<1x1x128xf32>
    %75 = vector.shape_cast %74 : vector<1x1x128xf32> to vector<1x128xf32>
    %cst_28 = arith.constant dense<0.000000e+00> : vector<16xf32>
    %76 = vector.multi_reduction <add>, %69, %cst_28 [1] : vector<16x128xf32> to vector<16xf32>
    %77 = vector.shape_cast %76 : vector<16xf32> to vector<16x1xf32>
    %cst_29 = arith.constant 1.280000e+02 : f32
    %78 = vector.broadcast %cst_29 : f32 to vector<16x1xf32>
    %79 = arith.divf %77, %78 : vector<16x1xf32>
    %80 = vector.broadcast %79 : vector<16x1xf32> to vector<16x128xf32>
    %81 = arith.subf %69, %80 : vector<16x128xf32>
    %82 = arith.mulf %81, %81 : vector<16x128xf32>
    %cst_30 = arith.constant dense<0.000000e+00> : vector<16xf32>
    %83 = vector.multi_reduction <add>, %82, %cst_30 [1] : vector<16x128xf32> to vector<16xf32>
    %84 = vector.shape_cast %83 : vector<16xf32> to vector<16x1xf32>
    %cst_31 = arith.constant 1.280000e+02 : f32
    %85 = vector.broadcast %cst_31 : f32 to vector<16x1xf32>
    %86 = arith.divf %84, %85 : vector<16x1xf32>
    %cst_32 = arith.constant 9.99999974E-6 : f32
    %87 = vector.broadcast %cst_32 : f32 to vector<16x1xf32>
    %88 = arith.addf %86, %87 : vector<16x1xf32>
    %89 = math.rsqrt %88 : vector<16x1xf32>
    %90 = vector.broadcast %89 : vector<16x1xf32> to vector<16x128xf32>
    %91 = arith.mulf %81, %90 : vector<16x128xf32>
    %92 = vector.broadcast %72 : vector<1x128xf32> to vector<16x128xf32>
    %93 = arith.mulf %91, %92 : vector<16x128xf32>
    %94 = vector.broadcast %75 : vector<1x128xf32> to vector<16x128xf32>
    %95 = arith.addf %93, %94 : vector<16x128xf32>
    %96 = arith.truncf %95 : vector<16x128xf32> to vector<16x128xbf16>
    %c0_33 = arith.constant 0 : index
    %c0_34 = arith.constant 0 : index
    %c0_35 = arith.constant 0 : index
    %97 = vector.load %arg10[%c0_33, %c0_34, %c0_35] : memref<1x128x512xbf16, #tpu.memory_space<vmem>>, vector<1x128x512xbf16>
    %98 = vector.shape_cast %97 : vector<1x128x512xbf16> to vector<128x512xbf16>
    %cst_36 = arith.constant dense<0.000000e+00> : vector<16x512xf32>
    %99 = tpu.matmul %96, %98, %cst_36 {dimension_numbers = #tpu.dot_dimension_numbers<[1], [0], [0], [1], [0, 0, 1, 1], [], []>} : vector<16x128xbf16>, vector<128x512xbf16>, vector<16x512xf32> -> vector<16x512xf32>
    %100 = arith.index_cast %arg0 : i32 to index
    %c0_37 = arith.constant 0 : index
    %c0_38 = arith.constant 0 : index
    %101 = vector.load %arg11[%100, %c0_37, %c0_38] : memref<3x1x512xf32, #tpu.memory_space<vmem>>, vector<1x1x512xf32>
    %102 = vector.shape_cast %101 : vector<1x1x512xf32> to vector<1x512xf32>
    %103 = vector.broadcast %102 : vector<1x512xf32> to vector<16x512xf32>
    %104 = arith.addf %99, %103 : vector<16x512xf32>
    %105 = arith.truncf %104 : vector<16x512xf32> to vector<16x512xbf16>
    %106 = arith.mulf %105, %105 : vector<16x512xbf16>
    %107 = arith.mulf %105, %106 : vector<16x512xbf16>
    %cst_39 = arith.constant 4.467770e-02 : bf16
    %108 = vector.broadcast %cst_39 : bf16 to vector<16x512xbf16>
    %109 = arith.mulf %108, %107 : vector<16x512xbf16>
    %110 = arith.addf %105, %109 : vector<16x512xbf16>
    %cst_40 = arith.constant 7.968750e-01 : bf16
    %111 = vector.broadcast %cst_40 : bf16 to vector<16x512xbf16>
    %112 = arith.mulf %111, %110 : vector<16x512xbf16>
    %113 = math.tanh %112 : vector<16x512xbf16>
    %cst_41 = arith.constant 1.000000e+00 : bf16
    %114 = vector.broadcast %cst_41 : bf16 to vector<16x512xbf16>
    %115 = arith.addf %114, %113 : vector<16x512xbf16>
    %cst_42 = arith.constant 5.000000e-01 : bf16
    %116 = vector.broadcast %cst_42 : bf16 to vector<16x512xbf16>
    %117 = arith.mulf %116, %115 : vector<16x512xbf16>
    %118 = arith.mulf %105, %117 : vector<16x512xbf16>
    %c0_43 = arith.constant 0 : index
    %c0_44 = arith.constant 0 : index
    %c0_45 = arith.constant 0 : index
    %119 = vector.load %arg12[%c0_43, %c0_44, %c0_45] : memref<1x512x128xbf16, #tpu.memory_space<vmem>>, vector<1x512x128xbf16>
    %120 = vector.shape_cast %119 : vector<1x512x128xbf16> to vector<512x128xbf16>
    %cst_46 = arith.constant dense<0.000000e+00> : vector<16x128xf32>
    %121 = tpu.matmul %118, %120, %cst_46 {dimension_numbers = #tpu.dot_dimension_numbers<[1], [0], [0], [1], [0, 0, 1, 1], [], []>} : vector<16x512xbf16>, vector<512x128xbf16>, vector<16x128xf32> -> vector<16x128xf32>
    %122 = arith.index_cast %arg0 : i32 to index
    %c0_47 = arith.constant 0 : index
    %c0_48 = arith.constant 0 : index
    %123 = vector.load %arg13[%122, %c0_47, %c0_48] : memref<3x1x128xf32, #tpu.memory_space<vmem>>, vector<1x1x128xf32>
    %124 = vector.shape_cast %123 : vector<1x1x128xf32> to vector<1x128xf32>
    %125 = vector.broadcast %124 : vector<1x128xf32> to vector<16x128xf32>
    %126 = arith.addf %121, %125 : vector<16x128xf32>
    %127 = arith.addf %69, %126 : vector<16x128xf32>
    %c0_49 = arith.constant 0 : index
    %c0_50 = arith.constant 0 : index
    %128 = vector.load %arg16[%c0_49, %c0_50] : memref<16x128xf32, #tpu.memory_space<vmem>>, vector<16x128xf32>
    tpu.vector_store %arg16[%c0_49, %c0_50], %127 {strides = array<i32>} : memref<16x128xf32, #tpu.memory_space<vmem>>, vector<16x128xf32>,
    %c2_i32 = arith.constant 2 : i32
    %129 = arith.cmpi eq, %arg0, %c2_i32 : i32
    %130 = arith.extui %129 : i1 to i32
    %c0_i32_51 = arith.constant 0 : i32
    %131 = arith.cmpi ne, %130, %c0_i32_51 : i32
    scf.if %131 {
      %c0_52 = arith.constant 0 : index
      %c0_53 = arith.constant 0 : index
      %132 = vector.load %arg14[%c0_52, %c0_53] : memref<1x128xf32, #tpu.memory_space<vmem>>, vector<1x128xf32>
      %c0_54 = arith.constant 0 : index
      %c0_55 = arith.constant 0 : index
      %133 = vector.load %arg15[%c0_54, %c0_55] : memref<1x128xf32, #tpu.memory_space<vmem>>, vector<1x128xf32>
      %cst_56 = arith.constant dense<0.000000e+00> : vector<16xf32>
      %134 = vector.multi_reduction <add>, %127, %cst_56 [1] : vector<16x128xf32> to vector<16xf32>
      %135 = vector.shape_cast %134 : vector<16xf32> to vector<16x1xf32>
      %cst_57 = arith.constant 1.280000e+02 : f32
      %136 = vector.broadcast %cst_57 : f32 to vector<16x1xf32>
      %137 = arith.divf %135, %136 : vector<16x1xf32>
      %138 = vector.broadcast %137 : vector<16x1xf32> to vector<16x128xf32>
      %139 = arith.subf %127, %138 : vector<16x128xf32>
      %140 = arith.mulf %139, %139 : vector<16x128xf32>
      %cst_58 = arith.constant dense<0.000000e+00> : vector<16xf32>
      %141 = vector.multi_reduction <add>, %140, %cst_58 [1] : vector<16x128xf32> to vector<16xf32>
      %142 = vector.shape_cast %141 : vector<16xf32> to vector<16x1xf32>
      %cst_59 = arith.constant 1.280000e+02 : f32
      %143 = vector.broadcast %cst_59 : f32 to vector<16x1xf32>
      %144 = arith.divf %142, %143 : vector<16x1xf32>
      %cst_60 = arith.constant 9.99999974E-6 : f32
      %145 = vector.broadcast %cst_60 : f32 to vector<16x1xf32>
      %146 = arith.addf %144, %145 : vector<16x1xf32>
      %147 = math.rsqrt %146 : vector<16x1xf32>
      %148 = vector.broadcast %147 : vector<16x1xf32> to vector<16x128xf32>
      %149 = arith.mulf %139, %148 : vector<16x128xf32>
      %150 = vector.broadcast %132 : vector<1x128xf32> to vector<16x128xf32>
      %151 = arith.mulf %149, %150 : vector<16x128xf32>
      %152 = vector.broadcast %133 : vector<1x128xf32> to vector<16x128xf32>
      %153 = arith.addf %151, %152 : vector<16x128xf32>
      %c0_61 = arith.constant 0 : index
      %c0_62 = arith.constant 0 : index
      %154 = vector.load %arg16[%c0_61, %c0_62] : memref<16x128xf32, #tpu.memory_space<vmem>>, vector<16x128xf32>
      tpu.vector_store %arg16[%c0_61, %c0_62], %153 {strides = array<i32>} : memref<16x128xf32, #tpu.memory_space<vmem>>, vector<16x128xf32>,
    } else {
    }
    return
  }
  func.func @transform_0(%arg0: i32) -> (i32, i32) {
    %c0_i32 = arith.constant 0 : i32
    %c0_i32_0 = arith.constant 0 : i32
    %c0_i32_1 = arith.constant 0 : i32
    return %c0_i32, %c0_i32_0 : i32, i32
  }
  func.func @transform_1(%arg0: i32) -> (i32, i32, i32) {
    %c0_i32 = arith.constant 0 : i32
    %c0_i32_0 = arith.constant 0 : i32
    %c0_i32_1 = arith.constant 0 : i32
    %c0_i32_2 = arith.constant 0 : i32
    return %c0_i32, %c0_i32_0, %c0_i32_1 : i32, i32, i32
  }
  func.func @transform_2(%arg0: i32) -> (i32, i32, i32) {
    %c0_i32 = arith.constant 0 : i32
    %c0_i32_0 = arith.constant 0 : i32
    %c0_i32_1 = arith.constant 0 : i32
    %c0_i32_2 = arith.constant 0 : i32
    return %c0_i32, %c0_i32_0, %c0_i32_1 : i32, i32, i32
  }
  func.func @transform_3(%arg0: i32) -> (i32, i32, i32) {
    %c0_i32 = arith.constant 0 : i32
    %c0_i32_0 = arith.constant 0 : i32
    %c0_i32_1 = arith.constant 0 : i32
    %c0_i32_2 = arith.constant 0 : i32
    return %c0_i32, %c0_i32_0, %c0_i32_1 : i32, i32, i32
  }
  func.func @transform_4(%arg0: i32) -> (i32, i32, i32) {
    %c0_i32 = arith.constant 0 : i32
    %c0_i32_0 = arith.constant 0 : i32
    %c0_i32_1 = arith.constant 0 : i32
    %c0_i32_2 = arith.constant 0 : i32
    return %c0_i32, %c0_i32_0, %c0_i32_1 : i32, i32, i32
  }
  func.func @transform_5(%arg0: i32) -> (i32, i32, i32) {
    %c0_i32 = arith.constant 0 : i32
    %c0_i32_0 = arith.constant 0 : i32
    %c0_i32_1 = arith.constant 0 : i32
    %c0_i32_2 = arith.constant 0 : i32
    return %c0_i32, %c0_i32_0, %c0_i32_1 : i32, i32, i32
  }
  func.func @transform_6(%arg0: i32) -> (i32, i32, i32) {
    %c0_i32 = arith.constant 0 : i32
    %c0_i32_0 = arith.constant 0 : i32
    %c0_i32_1 = arith.constant 0 : i32
    %c0_i32_2 = arith.constant 0 : i32
    return %c0_i32, %c0_i32_0, %c0_i32_1 : i32, i32, i32
  }
  func.func @transform_7(%arg0: i32) -> (i32, i32, i32) {
    %c0_i32 = arith.constant 0 : i32
    %c0_i32_0 = arith.constant 0 : i32
    %c0_i32_1 = arith.constant 0 : i32
    %c0_i32_2 = arith.constant 0 : i32
    return %c0_i32, %c0_i32_0, %c0_i32_1 : i32, i32, i32
  }
  func.func @transform_8(%arg0: i32) -> (i32, i32, i32) {
    %c0_i32 = arith.constant 0 : i32
    %c0_i32_0 = arith.constant 0 : i32
    %c0_i32_1 = arith.constant 0 : i32
    %c0_i32_2 = arith.constant 0 : i32
    return %c0_i32, %c0_i32_0, %c0_i32_1 : i32, i32, i32
  }
  func.func @transform_9(%arg0: i32) -> (i32, i32, i32) {
    %c0_i32 = arith.constant 0 : i32
    %c0_i32_0 = arith.constant 0 : i32
    %c0_i32_1 = arith.constant 0 : i32
    return %arg0, %c0_i32, %c0_i32_0 : i32, i32, i32
  }
  func.func @transform_10(%arg0: i32) -> (i32, i32, i32) {
    %c0_i32 = arith.constant 0 : i32
    %c0_i32_0 = arith.constant 0 : i32
    %c0_i32_1 = arith.constant 0 : i32
    %c0_i32_2 = arith.constant 0 : i32
    return %c0_i32, %c0_i32_0, %c0_i32_1 : i32, i32, i32
  }
  func.func @transform_11(%arg0: i32) -> (i32, i32, i32) {
    %c0_i32 = arith.constant 0 : i32
    %c0_i32_0 = arith.constant 0 : i32
    %c0_i32_1 = arith.constant 0 : i32
    return %arg0, %c0_i32, %c0_i32_0 : i32, i32, i32
  }
  func.func @transform_12(%arg0: i32) -> (i32, i32, i32) {
    %c0_i32 = arith.constant 0 : i32
    %c0_i32_0 = arith.constant 0 : i32
    %c0_i32_1 = arith.constant 0 : i32
    %c0_i32_2 = arith.constant 0 : i32
    return %c0_i32, %c0_i32_0, %c0_i32_1 : i32, i32, i32
  }
  func.func @transform_13(%arg0: i32) -> (i32, i32) {
    %c0_i32 = arith.constant 0 : i32
    %c0_i32_0 = arith.constant 0 : i32
    %c0_i32_1 = arith.constant 0 : i32
    return %c0_i32, %c0_i32_0 : i32, i32
  }
  func.func @transform_14(%arg0: i32) -> (i32, i32) {
    %c0_i32 = arith.constant 0 : i32
    %c0_i32_0 = arith.constant 0 : i32
    %c0_i32_1 = arith.constant 0 : i32
    return %c0_i32, %c0_i32_0 : i32, i32
  }
  func.func @transform_15(%arg0: i32) -> (i32, i32) {
    %c0_i32 = arith.constant 0 : i32
    %c0_i32_0 = arith.constant 0 : i32
    %c0_i32_1 = arith.constant 0 : i32
    return %c0_i32, %c0_i32_0 : i32, i32
  }
}

</mosaic_0001>

<llo_original>
// kernel: tpu_custom_call.1
$region0: #{tpu_custom_call.1}
  #allocation0 [shape = 'u32[]', space=smem, size = 0x4, offset = 0x4, fixed_abs, tag = 'smem constant byte address 0x4 - core index']
  #allocation1 [shape = 'u32[144,128]{1,0:T(1,128)}', space=vmem, size = 0x12000, scoped, tag = 'internal scratch']
  %s0 = inlined_call_operand.vmem [shape: f32[16,128], index: 0, kind: input, shape index: {}]
  %s1 = inlined_call_operand.vmem [shape: f32[3,1,128], index: 1, kind: input, shape index: {}]
  %s2 = inlined_call_operand.vmem [shape: f32[3,1,128], index: 2, kind: input, shape index: {}]
  %s3 = inlined_call_operand.vmem [shape: bf16[3,32,8], index: 3, kind: input, shape index: {}]
  %s4 = inlined_call_operand.vmem [shape: f32[3,32,1], index: 4, kind: input, shape index: {}]
  %s5 = inlined_call_operand.vmem [shape: bf16[3,8,32], index: 5, kind: input, shape index: {}]
  %s6 = inlined_call_operand.vmem [shape: f32[3,8,1], index: 6, kind: input, shape index: {}]
  %s7 = inlined_call_operand.vmem [shape: f32[3,1,128], index: 7, kind: input, shape index: {}]
  %s8 = inlined_call_operand.vmem [shape: f32[3,1,128], index: 8, kind: input, shape index: {}]
  %s9 = inlined_call_operand.hbm [shape: bf16[3,128,512], index: 9, kind: input, shape index: {}]
  %s10 = inlined_call_operand.vmem [shape: f32[3,1,512], index: 10, kind: input, shape index: {}]
  %s11 = inlined_call_operand.hbm [shape: bf16[3,512,128], index: 11, kind: input, shape index: {}]
  %s12 = inlined_call_operand.vmem [shape: f32[3,1,128], index: 12, kind: input, shape index: {}]
  %s13 = inlined_call_operand.vmem [shape: f32[1,128], index: 13, kind: input, shape index: {}]
  %s14 = inlined_call_operand.vmem [shape: f32[1,128], index: 14, kind: input, shape index: {}]
  %s15 = inlined_call_operand.hbm [shape: f32[16,128], index: 15, kind: output, shape index: {}]
  %s16 = sld [smem:[#allocation0]]
  $region109: #{tpu_custom_call.1} parent=0
    _
  %s18 = ssub.s32 1, %s16
  %s19 = scalar_select 0, %s18, %s16
  $region1: #{tpu_custom_call.1} parent=0
    #allocation2 [shape = 'u8[262144]{0}', space=vmem, size = 0x40000, scoped, tag = 'input window, operand 9']
    #allocation3 [shape = 's32[2]{0}', space=sflag, size = 0x8, scoped, tag = 'scoped memory for tpu_custom_call.1']
    #allocation4 [shape = 's32[2]{0}', space=sflag, size = 0x8, scoped, tag = 'scoped memory for tpu_custom_call.1']
    #allocation5 [shape = 'u8[262144]{0}', space=vmem, size = 0x40000, scoped, tag = 'input window, operand 11']
    #allocation6 [shape = 's32[2]{0}', space=sflag, size = 0x8, scoped, tag = 'scoped memory for tpu_custom_call.1']
    #allocation7 [shape = 'u8[8192]{0}', space=vmem, size = 0x2000, scoped, tag = 'output window, operand 0, single buffered']
    %20 = vsyncpa [#allocation3], 0
    %s21 = scalar_lea.sflag [#allocation3], 1
    %22 = vsyncpa %s21, 0
    %23 = vsyncpa [#allocation6], 0
    %s24 = scalar_lea.sflag [#allocation6], 1
    %25 = vsyncpa %s24, 0
    %26 = vsyncpa [#allocation4], 0
    loop: start=0, step=1, limit=5
    $region2: #{tpu_custom_call.1} parent=1 // loop_pre_header
      _
    $region3: #{tpu_custom_call.1} parent=1 // loop_header
      %s28 = sphi 0, %s32
      %p29 = scmp.ge.s32.totalorder %s28, 5
      %s36 = sphi 0, %s36
      %s38 = sphi 0, %s36
      %s39 = sphi 0, %s38
      %s53 = sphi 0, %s39
      %s57 = sphi 0, %s57
      %s59 = sphi 0, %s57
      %s60 = sphi 0, %s59
      %s74 = sphi 0, %s60
      %s78 = sphi 0, %s78
      %s80 = sphi 0, %s78
      %s81 = sphi 0, %s80
      %s95 = sphi 0, %s81
      %s99 = sphi 0, %s99
      %s101 = sphi 0, %s99
      %s102 = sphi 0, %s101
      %s116 = sphi 0, %s102
      %s120 = sphi 0, %s120
      %s122 = sphi 0, %s120
      %s123 = sphi 0, %s122
      %s137 = sphi 0, %s123
      %s141 = sphi 0, %s141
      %s143 = sphi 0, %s141
      %s144 = sphi 0, %s143
      %s158 = sphi 0, %s144
      %s162 = sphi 0, %s162
      %s164 = sphi 0, %s162
      %s165 = sphi 0, %s164
      %s179 = sphi 0, %s165
      %s183 = sphi 0, %s183
      %s185 = sphi 0, %s183
      %s186 = sphi 0, %s185
      %s200 = sphi 0, %s186
      %s204 = sphi 0, %s204
      %s206 = sphi 0, %s204
      %s207 = sphi 0, %s206
      %s221 = sphi 0, %s207
      %s227 = sphi 0, %s229
      %s230 = sphi 0, %s227
      %s231 = sphi 0, %s230
      %s247 = sphi 0, %s231
      %s251 = sphi 0, %s251
      %s253 = sphi 0, %s251
      %s254 = sphi 0, %s253
      %s268 = sphi 0, %s254
      %s274 = sphi 0, %s276
      %s277 = sphi 0, %s274
      %s278 = sphi 0, %s277
      %s294 = sphi 0, %s278
      %s298 = sphi 0, %s298
      %s300 = sphi 0, %s298
      %s301 = sphi 0, %s300
      %s315 = sphi 0, %s301
      %s319 = sphi 0, %s319
      %s321 = sphi 0, %s319
      %s322 = sphi 0, %s321
      %s336 = sphi 0, %s322
      %s340 = sphi 0, %s340
      %s342 = sphi 0, %s340
      %s343 = sphi 0, %s342
      %s357 = sphi 0, %s343
      %s361 = sphi 0, %s361
      %s363 = sphi 0, %s361
      %s364 = sphi 0, %s363
      %s378 = sphi 0, %s364
    $region4: #{tpu_custom_call.1} parent=1 // loop_header_branch
      %31 = sbr.rel (%p29) target = $region8
    $region5: #{tpu_custom_call.1} parent=1 // loop_body
      %s33 = ssub.s32 %s28, 1
      %s34 = ssub.s32 %s28, 2
      %s35 = sadd.s32 %s28, 1
      %s37 = sadd.s32 %s36, 1
      %p40 = scmp.eq.s32.totalorder %s28, 2
      %p41 = scmp.ne.s32.totalorder %s36, %s38
      %p42 = scmp.eq.s32.totalorder %s28, 0
      %p43 = por %p41, %p42
      %p44 = scmp.ne.s32.totalorder %s36, %s38
      %p45 = scmp.eq.s32.totalorder %s33, 2
      %p46 = por %p44, %p45
      %p47 = scmp.ne.s32.totalorder %s38, %s39
      %p48 = scmp.eq.s32.totalorder %s33, 0
      %p49 = por %p47, %p48
      %p50 = scmp.ne.s32.totalorder %s38, %s39
      %p51 = scmp.eq.s32.totalorder %s34, 2
      %p52 = por %p50, %p51
      %p54 = scmp.ne.s32.totalorder %s39, %s53
      %p55 = scmp.eq.s32.totalorder %s34, 0
      %p56 = por %p54, %p55
      %s58 = sadd.s32 %s57, 1
      %p61 = scmp.eq.s32.totalorder %s28, 2
      %p62 = scmp.ne.s32.totalorder %s57, %s59
      %p63 = scmp.eq.s32.totalorder %s28, 0
      %p64 = por %p62, %p63
      %p65 = scmp.ne.s32.totalorder %s57, %s59
      %p66 = scmp.eq.s32.totalorder %s33, 2
      %p67 = por %p65, %p66
      %p68 = scmp.ne.s32.totalorder %s59, %s60
      %p69 = scmp.eq.s32.totalorder %s33, 0
      %p70 = por %p68, %p69
      %p71 = scmp.ne.s32.totalorder %s59, %s60
      %p72 = scmp.eq.s32.totalorder %s34, 2
      %p73 = por %p71, %p72
      %p75 = scmp.ne.s32.totalorder %s60, %s74
      %p76 = scmp.eq.s32.totalorder %s34, 0
      %p77 = por %p75, %p76
      %s79 = sadd.s32 %s78, 1
      %p82 = scmp.eq.s32.totalorder %s28, 2
      %p83 = scmp.ne.s32.totalorder %s78, %s80
      %p84 = scmp.eq.s32.totalorder %s28, 0
      %p85 = por %p83, %p84
      %p86 = scmp.ne.s32.totalorder %s78, %s80
      %p87 = scmp.eq.s32.totalorder %s33, 2
      %p88 = por %p86, %p87
      %p89 = scmp.ne.s32.totalorder %s80, %s81
      %p90 = scmp.eq.s32.totalorder %s33, 0
      %p91 = por %p89, %p90
      %p92 = scmp.ne.s32.totalorder %s80, %s81
      %p93 = scmp.eq.s32.totalorder %s34, 2
      %p94 = por %p92, %p93
      %p96 = scmp.ne.s32.totalorder %s81, %s95
      %p97 = scmp.eq.s32.totalorder %s34, 0
      %p98 = por %p96, %p97
      %s100 = sadd.s32 %s99, 1
      %p103 = scmp.eq.s32.totalorder %s28, 2
      %p104 = scmp.ne.s32.totalorder %s99, %s101
      %p105 = scmp.eq.s32.totalorder %s28, 0
      %p106 = por %p104, %p105
      %p107 = scmp.ne.s32.totalorder %s99, %s101
      %p108 = scmp.eq.s32.totalorder %s33, 2
      %p109 = por %p107, %p108
      %p110 = scmp.ne.s32.totalorder %s101, %s102
      %p111 = scmp.eq.s32.totalorder %s33, 0
      %p112 = por %p110, %p111
      %p113 = scmp.ne.s32.totalorder %s101, %s102
      %p114 = scmp.eq.s32.totalorder %s34, 2
      %p115 = por %p113, %p114
      %p117 = scmp.ne.s32.totalorder %s102, %s116
      %p118 = scmp.eq.s32.totalorder %s34, 0
      %p119 = por %p117, %p118
      %s121 = sadd.s32 %s120, 1
      %p124 = scmp.eq.s32.totalorder %s28, 2
      %p125 = scmp.ne.s32.totalorder %s120, %s122
      %p126 = scmp.eq.s32.totalorder %s28, 0
      %p127 = por %p125, %p126
      %p128 = scmp.ne.s32.totalorder %s120, %s122
      %p129 = scmp.eq.s32.totalorder %s33, 2
      %p130 = por %p128, %p129
      %p131 = scmp.ne.s32.totalorder %s122, %s123
      %p132 = scmp.eq.s32.totalorder %s33, 0
      %p133 = por %p131, %p132
      %p134 = scmp.ne.s32.totalorder %s122, %s123
      %p135 = scmp.eq.s32.totalorder %s34, 2
      %p136 = por %p134, %p135
      %p138 = scmp.ne.s32.totalorder %s123, %s137
      %p139 = scmp.eq.s32.totalorder %s34, 0
      %p140 = por %p138, %p139
      %s142 = sadd.s32 %s141, 1
      %p145 = scmp.eq.s32.totalorder %s28, 2
      %p146 = scmp.ne.s32.totalorder %s141, %s143
      %p147 = scmp.eq.s32.totalorder %s28, 0
      %p148 = por %p146, %p147
      %p149 = scmp.ne.s32.totalorder %s141, %s143
      %p150 = scmp.eq.s32.totalorder %s33, 2
      %p151 = por %p149, %p150
      %p152 = scmp.ne.s32.totalorder %s143, %s144
      %p153 = scmp.eq.s32.totalorder %s33, 0
      %p154 = por %p152, %p153
      %p155 = scmp.ne.s32.totalorder %s143, %s144
      %p156 = scmp.eq.s32.totalorder %s34, 2
      %p157 = por %p155, %p156
      %p159 = scmp.ne.s32.totalorder %s144, %s158
      %p160 = scmp.eq.s32.totalorder %s34, 0
      %p161 = por %p159, %p160
      %s163 = sadd.s32 %s162, 1
      %p166 = scmp.eq.s32.totalorder %s28, 2
      %p167 = scmp.ne.s32.totalorder %s162, %s164
      %p168 = scmp.eq.s32.totalorder %s28, 0
      %p169 = por %p167, %p168
      %p170 = scmp.ne.s32.totalorder %s162, %s164
      %p171 = scmp.eq.s32.totalorder %s33, 2
      %p172 = por %p170, %p171
      %p173 = scmp.ne.s32.totalorder %s164, %s165
      %p174 = scmp.eq.s32.totalorder %s33, 0
      %p175 = por %p173, %p174
      %p176 = scmp.ne.s32.totalorder %s164, %s165
      %p177 = scmp.eq.s32.totalorder %s34, 2
      %p178 = por %p176, %p177
      %p180 = scmp.ne.s32.totalorder %s165, %s179
      %p181 = scmp.eq.s32.totalorder %s34, 0
      %p182 = por %p180, %p181
      %s184 = sadd.s32 %s183, 1
      %p187 = scmp.eq.s32.totalorder %s28, 2
      %p188 = scmp.ne.s32.totalorder %s183, %s185
      %p189 = scmp.eq.s32.totalorder %s28, 0
      %p190 = por %p188, %p189
      %p191 = scmp.ne.s32.totalorder %s183, %s185
      %p192 = scmp.eq.s32.totalorder %s33, 2
      %p193 = por %p191, %p192
      %p194 = scmp.ne.s32.totalorder %s185, %s186
      %p195 = scmp.eq.s32.totalorder %s33, 0
      %p196 = por %p194, %p195
      %p197 = scmp.ne.s32.totalorder %s185, %s186
      %p198 = scmp.eq.s32.totalorder %s34, 2
      %p199 = por %p197, %p198
      %p201 = scmp.ne.s32.totalorder %s186, %s200
      %p202 = scmp.eq.s32.totalorder %s34, 0
      %p203 = por %p201, %p202
      %s205 = sadd.s32 %s204, 1
      %p208 = scmp.eq.s32.totalorder %s28, 2
      %p209 = scmp.ne.s32.totalorder %s204, %s206
      %p210 = scmp.eq.s32.totalorder %s28, 0
      %p211 = por %p209, %p210
      %p212 = scmp.ne.s32.totalorder %s204, %s206
      %p213 = scmp.eq.s32.totalorder %s33, 2
      %p214 = por %p212, %p213
      %p215 = scmp.ne.s32.totalorder %s206, %s207
      %p216 = scmp.eq.s32.totalorder %s33, 0
      %p217 = por %p215, %p216
      %p218 = scmp.ne.s32.totalorder %s206, %s207
      %p219 = scmp.eq.s32.totalorder %s34, 2
      %p220 = por %p218, %p219
      %p222 = scmp.ne.s32.totalorder %s207, %s221
      %p223 = scmp.eq.s32.totalorder %s34, 0
      %p224 = por %p222, %p223
      %s225 = ssub.s32 %s28, %s35
      %p226 = scmp.eq.s32.totalorder %s225, 0
      %s228 = sadd.s32 %s227, 1
      %s229 = scalar_select %p226, %s227, %s228
      %p232 = pneg %p226
      %p233 = scmp.eq.s32.totalorder %s28, 2
      %p234 = por %p232, %p233
      %p235 = scmp.ne.s32.totalorder %s227, %s230
      %p236 = scmp.eq.s32.totalorder %s28, 0
      %p237 = por %p235, %p236
      %p238 = scmp.ne.s32.totalorder %s227, %s230
      %p239 = scmp.eq.s32.totalorder %s33, 2
      %p240 = por %p238, %p239
      %p241 = scmp.ne.s32.totalorder %s230, %s231
      %p242 = scmp.eq.s32.totalorder %s33, 0
      %p243 = por %p241, %p242
      %p244 = scmp.ne.s32.totalorder %s230, %s231
      %p245 = scmp.eq.s32.totalorder %s34, 2
      %p246 = por %p244, %p245
      %p248 = scmp.ne.s32.totalorder %s231, %s247
      %p249 = scmp.eq.s32.totalorder %s34, 0
      %p250 = por %p248, %p249
      %s252 = sadd.s32 %s251, 1
      %p255 = scmp.eq.s32.totalorder %s28, 2
      %p256 = scmp.ne.s32.totalorder %s251, %s253
      %p257 = scmp.eq.s32.totalorder %s28, 0
      %p258 = por %p256, %p257
      %p259 = scmp.ne.s32.totalorder %s251, %s253
      %p260 = scmp.eq.s32.totalorder %s33, 2
      %p261 = por %p259, %p260
      %p262 = scmp.ne.s32.totalorder %s253, %s254
      %p263 = scmp.eq.s32.totalorder %s33, 0
      %p264 = por %p262, %p263
      %p265 = scmp.ne.s32.totalorder %s253, %s254
      %p266 = scmp.eq.s32.totalorder %s34, 2
      %p267 = por %p265, %p266
      %p269 = scmp.ne.s32.totalorder %s254, %s268
      %p270 = scmp.eq.s32.totalorder %s34, 0
      %p271 = por %p269, %p270
      %s272 = ssub.s32 %s28, %s35
      %p273 = scmp.eq.s32.totalorder %s272, 0
      %s275 = sadd.s32 %s274, 1
      %s276 = scalar_select %p273, %s274, %s275
      %p279 = pneg %p273
      %p280 = scmp.eq.s32.totalorder %s28, 2
      %p281 = por %p279, %p280
      %p282 = scmp.ne.s32.totalorder %s274, %s277
      %p283 = scmp.eq.s32.totalorder %s28, 0
      %p284 = por %p282, %p283
      %p285 = scmp.ne.s32.totalorder %s274, %s277
      %p286 = scmp.eq.s32.totalorder %s33, 2
      %p287 = por %p285, %p286
      %p288 = scmp.ne.s32.totalorder %s277, %s278
      %p289 = scmp.eq.s32.totalorder %s33, 0
      %p290 = por %p288, %p289
      %p291 = scmp.ne.s32.totalorder %s277, %s278
      %p292 = scmp.eq.s32.totalorder %s34, 2
      %p293 = por %p291, %p292
      %p295 = scmp.ne.s32.totalorder %s278, %s294
      %p296 = scmp.eq.s32.totalorder %s34, 0
      %p297 = por %p295, %p296
      %s299 = sadd.s32 %s298, 1
      %p302 = scmp.eq.s32.totalorder %s28, 2
      %p303 = scmp.ne.s32.totalorder %s298, %s300
      %p304 = scmp.eq.s32.totalorder %s28, 0
      %p305 = por %p303, %p304
      %p306 = scmp.ne.s32.totalorder %s298, %s300
      %p307 = scmp.eq.s32.totalorder %s33, 2
      %p308 = por %p306, %p307
      %p309 = scmp.ne.s32.totalorder %s300, %s301
      %p310 = scmp.eq.s32.totalorder %s33, 0
      %p311 = por %p309, %p310
      %p312 = scmp.ne.s32.totalorder %s300, %s301
      %p313 = scmp.eq.s32.totalorder %s34, 2
      %p314 = por %p312, %p313
      %p316 = scmp.ne.s32.totalorder %s301, %s315
      %p317 = scmp.eq.s32.totalorder %s34, 0
      %p318 = por %p316, %p317
      %s320 = sadd.s32 %s319, 1
      %p323 = scmp.eq.s32.totalorder %s28, 2
      %p324 = scmp.ne.s32.totalorder %s319, %s321
      %p325 = scmp.eq.s32.totalorder %s28, 0
      %p326 = por %p324, %p325
      %p327 = scmp.ne.s32.totalorder %s319, %s321
      %p328 = scmp.eq.s32.totalorder %s33, 2
      %p329 = por %p327, %p328
      %p330 = scmp.ne.s32.totalorder %s321, %s322
      %p331 = scmp.eq.s32.totalorder %s33, 0
      %p332 = por %p330, %p331
      %p333 = scmp.ne.s32.totalorder %s321, %s322
      %p334 = scmp.eq.s32.totalorder %s34, 2
      %p335 = por %p333, %p334
      %p337 = scmp.ne.s32.totalorder %s322, %s336
      %p338 = scmp.eq.s32.totalorder %s34, 0
      %p339 = por %p337, %p338
      %s341 = sadd.s32 %s340, 1
      %p344 = scmp.eq.s32.totalorder %s28, 2
      %p345 = scmp.ne.s32.totalorder %s340, %s342
      %p346 = scmp.eq.s32.totalorder %s28, 0
      %p347 = por %p345, %p346
      %p348 = scmp.ne.s32.totalorder %s340, %s342
      %p349 = scmp.eq.s32.totalorder %s33, 2
      %p350 = por %p348, %p349
      %p351 = scmp.ne.s32.totalorder %s342, %s343
      %p352 = scmp.eq.s32.totalorder %s33, 0
      %p353 = por %p351, %p352
      %p354 = scmp.ne.s32.totalorder %s342, %s343
      %p355 = scmp.eq.s32.totalorder %s34, 2
      %p356 = por %p354, %p355
      %p358 = scmp.ne.s32.totalorder %s343, %s357
      %p359 = scmp.eq.s32.totalorder %s34, 0
      %p360 = por %p358, %p359
      %s362 = sadd.s32 %s361, 1
      %p365 = scmp.eq.s32.totalorder %s28, 2
      %p366 = scmp.ne.s32.totalorder %s361, %s363
      %p367 = scmp.eq.s32.totalorder %s28, 0
      %p368 = por %p366, %p367
      %p369 = scmp.ne.s32.totalorder %s361, %s363
      %p370 = scmp.eq.s32.totalorder %s33, 2
      %p371 = por %p369, %p370
      %p372 = scmp.ne.s32.totalorder %s363, %s364
      %p373 = scmp.eq.s32.totalorder %s33, 0
      %p374 = por %p372, %p373
      %p375 = scmp.ne.s32.totalorder %s363, %s364
      %p376 = scmp.eq.s32.totalorder %s34, 2
      %p377 = por %p375, %p376
      %p379 = scmp.ne.s32.totalorder %s364, %s378
      %p380 = scmp.eq.s32.totalorder %s34, 0
      %p381 = por %p379, %p380
      %p382 = scmp.le.s32.totalorder 1, %s28
      %p383 = scmp.lt.s32.totalorder %s28, 4
      %p384 = pnand %p382, %p383
      %p385 = pneg %p384
      // Predicated region
      $region9: #{tpu_custom_call.1} parent=5 // pred_check
        _
      $region10: #{tpu_custom_call.1} parent=5 // pred_check_branch
        %387 = sbr.rel (%p384) target = $region12
      $region11: #{tpu_custom_call.1} parent=5 // pred_region
        %s388 = ssub.s32 %s28, 1
        // Predicated region
        $region13: #{tpu_custom_call.1} parent=11 // pred_check
          %p389 = pneg %p49
        $region14: #{tpu_custom_call.1} parent=11 // pred_check_branch
          %391 = sbr.rel (%p389) target = $region16
        $region15: #{tpu_custom_call.1} parent=11 // pred_region
          _
        $region16: #{tpu_custom_call.1} parent=11 // pred_fallthru
          _
        // Predicated region
        $region17: #{tpu_custom_call.1} parent=11 // pred_check
          %p392 = pneg %p70
        $region18: #{tpu_custom_call.1} parent=11 // pred_check_branch
          %394 = sbr.rel (%p392) target = $region20
        $region19: #{tpu_custom_call.1} parent=11 // pred_region
          _
        $region20: #{tpu_custom_call.1} parent=11 // pred_fallthru
          _
        // Predicated region
        $region21: #{tpu_custom_call.1} parent=11 // pred_check
          %p395 = pneg %p91
        $region22: #{tpu_custom_call.1} parent=11 // pred_check_branch
          %397 = sbr.rel (%p395) target = $region24
        $region23: #{tpu_custom_call.1} parent=11 // pred_region
          _
        $region24: #{tpu_custom_call.1} parent=11 // pred_fallthru
          _
        // Predicated region
        $region25: #{tpu_custom_call.1} parent=11 // pred_check
          %p398 = pneg %p112
        $region26: #{tpu_custom_call.1} parent=11 // pred_check_branch
          %400 = sbr.rel (%p398) target = $region28
        $region27: #{tpu_custom_call.1} parent=11 // pred_region
          _
        $region28: #{tpu_custom_call.1} parent=11 // pred_fallthru
          _
        // Predicated region
        $region29: #{tpu_custom_call.1} parent=11 // pred_check
          %p401 = pneg %p133
        $region30: #{tpu_custom_call.1} parent=11 // pred_check_branch
          %403 = sbr.rel (%p401) target = $region32
        $region31: #{tpu_custom_call.1} parent=11 // pred_region
          _
        $region32: #{tpu_custom_call.1} parent=11 // pred_fallthru
          _
        // Predicated region
        $region33: #{tpu_custom_call.1} parent=11 // pred_check
          %p404 = pneg %p154
        $region34: #{tpu_custom_call.1} parent=11 // pred_check_branch
          %406 = sbr.rel (%p404) target = $region36
        $region35: #{tpu_custom_call.1} parent=11 // pred_region
          _
        $region36: #{tpu_custom_call.1} parent=11 // pred_fallthru
          _
        // Predicated region
        $region37: #{tpu_custom_call.1} parent=11 // pred_check
          %p407 = pneg %p175
        $region38: #{tpu_custom_call.1} parent=11 // pred_check_branch
          %409 = sbr.rel (%p407) target = $region40
        $region39: #{tpu_custom_call.1} parent=11 // pred_region
          _
        $region40: #{tpu_custom_call.1} parent=11 // pred_fallthru
          _
        // Predicated region
        $region41: #{tpu_custom_call.1} parent=11 // pred_check
          %p410 = pneg %p196
        $region42: #{tpu_custom_call.1} parent=11 // pred_check_branch
          %412 = sbr.rel (%p410) target = $region44
        $region43: #{tpu_custom_call.1} parent=11 // pred_region
          _
        $region44: #{tpu_custom_call.1} parent=11 // pred_fallthru
          _
        // Predicated region
        $region45: #{tpu_custom_call.1} parent=11 // pred_check
          %p413 = pneg %p217
        $region46: #{tpu_custom_call.1} parent=11 // pred_check_branch
          %415 = sbr.rel (%p413) target = $region48
        $region47: #{tpu_custom_call.1} parent=11 // pred_region
          _
        $region48: #{tpu_custom_call.1} parent=11 // pred_fallthru
          _
        // Predicated region
        $region49: #{tpu_custom_call.1} parent=11 // pred_check
          %p416 = pneg %p264
        $region50: #{tpu_custom_call.1} parent=11 // pred_check_branch
          %418 = sbr.rel (%p416) target = $region52
        $region51: #{tpu_custom_call.1} parent=11 // pred_region
          _
        $region52: #{tpu_custom_call.1} parent=11 // pred_fallthru
          _
        // Predicated region
        $region53: #{tpu_custom_call.1} parent=11 // pred_check
          %p419 = pneg %p311
        $region54: #{tpu_custom_call.1} parent=11 // pred_check_branch
          %421 = sbr.rel (%p419) target = $region56
        $region55: #{tpu_custom_call.1} parent=11 // pred_region
          _
        $region56: #{tpu_custom_call.1} parent=11 // pred_fallthru
          _
        // Predicated region
        $region57: #{tpu_custom_call.1} parent=11 // pred_check
          %p422 = pneg %p332
        $region58: #{tpu_custom_call.1} parent=11 // pred_check_branch
          %424 = sbr.rel (%p422) target = $region60
        $region59: #{tpu_custom_call.1} parent=11 // pred_region
          _
        $region60: #{tpu_custom_call.1} parent=11 // pred_fallthru
          _
        // Predicated region
        $region61: #{tpu_custom_call.1} parent=11 // pred_check
          %p425 = pneg %p353
        $region62: #{tpu_custom_call.1} parent=11 // pred_check_branch
          %427 = sbr.rel (%p425) target = $region64
        $region63: #{tpu_custom_call.1} parent=11 // pred_region
          _
        $region64: #{tpu_custom_call.1} parent=11 // pred_fallthru
          _
      $region12: #{tpu_custom_call.1} parent=5 // pred_fallthru
        _
      %p428 = scmp.lt.s32.totalorder %s28, 3
      // Predicated region
      $region65: #{tpu_custom_call.1} parent=5 // pred_check
        %p429 = pneg %p428
      $region66: #{tpu_custom_call.1} parent=5 // pred_check_branch
        %431 = sbr.rel (%p429) target = $region68
      $region67: #{tpu_custom_call.1} parent=5 // pred_region
        // Predicated region
        $region69: #{tpu_custom_call.1} parent=67 // pred_check
          %p432 = pneg %p237
        $region70: #{tpu_custom_call.1} parent=67 // pred_check_branch
          %434 = sbr.rel (%p432) target = $region72
        $region71: #{tpu_custom_call.1} parent=67 // pred_region
          %s435 = sand.u32 %s227, 1
          %s436 = scalar_lea.sflag [#allocation3], %s435
          %s437 = sand.u32 %s227, 1
          %s438 = smul.addr %s437, 256
          %s439 = scalar_lea.vmem [#allocation2], %s438
          %s441 = ssub.s32 4096, 4096
          %442 = vsyncadd %s436, %s441
          %s443 = smul.addr %s28, 64
          %s444 = smul.addr %s443, 64
          %s445 = scalar_lea.hbm %s9, %s444
          %s446 = sshll.u32 %s439, 4
          %s447 = int_to_ptr.vmem [resolvable:$true] %s446
          %452 = dma.hbm_to_vmem [thread:$0]  %s445, 4096, %s447, %s436, 256, 256, 16
        $region72: #{tpu_custom_call.1} parent=67 // pred_fallthru
          _
        // Predicated region
        $region73: #{tpu_custom_call.1} parent=67 // pred_check
          %p453 = pneg %p284
        $region74: #{tpu_custom_call.1} parent=67 // pred_check_branch
          %455 = sbr.rel (%p453) target = $region76
        $region75: #{tpu_custom_call.1} parent=67 // pred_region
          %s456 = sand.u32 %s274, 1
          %s457 = scalar_lea.sflag [#allocation6], %s456
          %s458 = sand.u32 %s274, 1
          %s459 = smul.addr %s458, 256
          %s460 = scalar_lea.vmem [#allocation5], %s459
          %s462 = ssub.s32 4096, 4096
          %463 = vsyncadd %s457, %s462
          %s464 = smul.addr %s28, 64
          %s465 = smul.addr %s464, 64
          %s466 = scalar_lea.hbm %s11, %s465
          %s467 = sshll.u32 %s460, 4
          %s468 = int_to_ptr.vmem [resolvable:$true] %s467
          %473 = dma.hbm_to_vmem [thread:$0]  %s466, 4096, %s468, %s457, 64, 64, 4
        $region76: #{tpu_custom_call.1} parent=67 // pred_fallthru
          _
      $region68: #{tpu_custom_call.1} parent=5 // pred_fallthru
        _
      %p474 = scmp.le.s32.totalorder 1, %s28
      %p475 = scmp.lt.s32.totalorder %s28, 4
      %p476 = pnand %p474, %p475
      %p477 = pneg %p476
      // Predicated region
      $region77: #{tpu_custom_call.1} parent=5 // pred_check
        _
      $region78: #{tpu_custom_call.1} parent=5 // pred_check_branch
        %479 = sbr.rel (%p476) target = $region80
      $region79: #{tpu_custom_call.1} parent=5 // pred_region
        %s480 = ssub.s32 %s28, 1
        %s481 = sand.u32 %s230, 1
        %s482 = scalar_lea.sflag [#allocation3], %s481
        %s483 = sand.u32 %s230, 1
        %s484 = smul.addr %s483, 256
        %s485 = scalar_lea.vmem [#allocation2], %s484
        // Predicated region
        $region81: #{tpu_custom_call.1} parent=79 // pred_check
          %p486 = pneg %p243
        $region82: #{tpu_custom_call.1} parent=79 // pred_check_branch
          %488 = sbr.rel (%p486) target = $region84
        $region83: #{tpu_custom_call.1} parent=79 // pred_region
          %489 = dma.done %s482, 4096
        $region84: #{tpu_custom_call.1} parent=79 // pred_fallthru
          _
        %s490 = sand.u32 %s277, 1
        %s491 = scalar_lea.sflag [#allocation6], %s490
        %s492 = sand.u32 %s277, 1
        %s493 = smul.addr %s492, 256
        %s494 = scalar_lea.vmem [#allocation5], %s493
        // Predicated region
        $region85: #{tpu_custom_call.1} parent=79 // pred_check
          %p495 = pneg %p290
        $region86: #{tpu_custom_call.1} parent=79 // pred_check_branch
          %497 = sbr.rel (%p495) target = $region88
        $region87: #{tpu_custom_call.1} parent=79 // pred_region
          %498 = dma.done %s491, 4096
        $region88: #{tpu_custom_call.1} parent=79 // pred_fallthru
          _
        %p499 = pneg %p49
        %p500 = pneg %p46
        %p501 = pneg %p70
        %p502 = pneg %p67
        %p503 = pneg %p91
        %p504 = pneg %p88
        %p505 = pneg %p112
        %p506 = pneg %p109
        %p507 = pneg %p133
        %p508 = pneg %p130
        %p509 = pneg %p154
        %p510 = pneg %p151
        %p511 = pneg %p175
        %p512 = pneg %p172
        %p513 = pneg %p196
        %p514 = pneg %p193
        %p515 = pneg %p217
        %p516 = pneg %p214
        %s517 = sand.u32 %s230, 1
        %s518 = scalar_lea.sflag [#allocation3], %s517
        %s519 = sand.u32 %s230, 1
        %s520 = smul.addr %s519, 256
        %s521 = scalar_lea.vmem [#allocation2], %s520
        %p522 = pneg %p243
        %p523 = pneg %p240
        %p524 = pneg %p264
        %p525 = pneg %p261
        %s526 = sand.u32 %s277, 1
        %s527 = scalar_lea.sflag [#allocation6], %s526
        %s528 = sand.u32 %s277, 1
        %s529 = smul.addr %s528, 256
        %s530 = scalar_lea.vmem [#allocation5], %s529
        %p531 = pneg %p290
        %p532 = pneg %p287
        %p533 = pneg %p311
        %p534 = pneg %p308
        %p535 = pneg %p332
        %p536 = pneg %p329
        %p537 = pneg %p353
        %p538 = pneg %p350
        %p539 = pneg %p374
        %p540 = pneg %p371
        %p546 = scmp.eq.s32.totalorder %s33, 0
        // Predicated region
        $region89: #{tpu_custom_call.1} parent=79 // pred_check
          %p547 = pneg %p546
        $region90: #{tpu_custom_call.1} parent=79 // pred_check_branch
          %549 = sbr.rel (%p547) target = $region92
        $region91: #{tpu_custom_call.1} parent=79 // pred_region
          %v550 = vld [vmem:[%s0] sm:$0xff]
          %v551 = vld [vmem:[%s0 + $0x8] sm:$0xff]
          %552 = vst [vmem:[#allocation7] sm:$0xff] %v550
          %553 = vst [vmem:[#allocation7 + $0x8] sm:$0xff] %v551
        $region92: #{tpu_custom_call.1} parent=79 // pred_fallthru
          _
        %v554 = vld [vmem:[#allocation7] sm:$0xff]
        %v555 = vld [vmem:[#allocation7 + $0x8] sm:$0xff]
        %s556 = scalar_lea.vmem %s1, %s33
        %v557 = vld [vmem:[%s556] sm:$0x1]
        %s558 = scalar_lea.vmem %s2, %s33
        %v559 = vld [vmem:[%s558] sm:$0x1]
        %560 = vadd.xlane.f32.xlu0 %v554
        %v561 = vpop.xlane.xlu0 %560
        %562 = vadd.xlane.f32.xlu0 %v555
        %v563 = vpop.xlane.xlu0 %562
        %v564 = vrcp.pop 128.0
        %v565 = vmul.f32 %v561, %v564
        %v566 = vmul.f32 %v563, %v564
        %v567 = vsub.f32 %v554, %v565
        %v568 = vsub.f32 %v555, %v566
        %v569 = vmul.f32 %v567, %v567
        %v570 = vmul.f32 %v568, %v568
        %571 = vadd.xlane.f32.xlu0 %v569
        %v572 = vpop.xlane.xlu0 %571
        %573 = vadd.xlane.f32.xlu0 %v570
        %v574 = vpop.xlane.xlu0 %573
        %v575 = vmul.f32 %v572, %v564
        %v576 = vmul.f32 %v574, %v564
        %v577 = vadd.f32 %v575, 1e-05
        %v578 = vadd.f32 %v576, 1e-05
        %v579 = vrsqrt.pop %v577
        %v580 = vrsqrt.pop %v578
        %v581 = vmul.f32 %v567, %v579
        %v582 = vmul.f32 %v568, %v580
        %v584 = vlaneseq
        %v585 = vshrl.u32 %v584, 7
        %v586 = vsub.s32 0, %v585
        %v587 = vrot.slane %v557, %v586
        %v589 = vmul.f32 %v581, %v587
        %v590 = vmul.f32 %v582, %v587
        %v592 = vlaneseq
        %v593 = vshrl.u32 %v592, 7
        %v594 = vsub.s32 0, %v593
        %v595 = vrot.slane %v559, %v594
        %v597 = vadd.f32 %v589, %v595
        %v598 = vadd.f32 %v590, %v595
        %v599 = vpack.c.bf16 %v598, %v597
        %v601 = vrot.slane %v599, 4
        %s602 = smul.u32 %s33, 4
        %s603 = smul.addr %s602, 4
        %s604 = scalar_lea.vmem %s3, %s603
        %v605 = vld [vmem:[%s604] sm:$0xf]
        %v606 = vld [vmem:[%s604 + $0x4] sm:$0xf]
        %v607 = vld [vmem:[%s604 + $0x8] sm:$0xf]
        %v608 = vld [vmem:[%s604 + $0xc] sm:$0xf]
        %s609 = smul.u32 %s33, 32
        %s610 = scalar_lea.vmem %s4, %s609
        %v611 = vld [vmem:[%s610] sm:$0xff]
        %v612 = vld [vmem:[%s610 + $0x8] sm:$0xff]
        %v613 = vld [vmem:[%s610 + $0x10] sm:$0xff]
        %v614 = vld [vmem:[%s610 + $0x18] sm:$0xff]
        %616 = vset.pattern.permute.xlu0 0
        %617 = vperm.xlu0 %616, %v611
        %v618 = vpop.permute.xlu0 %617
        %621 = vset.pattern.permute.xlu0 0
        %622 = vperm.xlu0 %621, %v612
        %v623 = vpop.permute.xlu0 %622
        %626 = vset.pattern.permute.xlu0 0
        %627 = vperm.xlu0 %626, %v613
        %v628 = vpop.permute.xlu0 %627
        %631 = vset.pattern.permute.xlu0 0
        %632 = vperm.xlu0 %631, %v614
        %v633 = vpop.permute.xlu0 %632
        %v639 = vunpack.c.l.b16 %v605
        %v640 = vunpack.c.l.b16 %v606
        %v641 = vunpack.c.l.b16 %v607
        %v642 = vunpack.c.l.b16 %v608
        %v643 = vpack.c.b16 %v640, %v639
        %v644 = vpack.c.b16 %v642, %v641
        %vm645 = vcmask 64512
        %v647 = vsel %vm645, %v643, 0
        %v650 = vsel %vm645, %v644, 0
        %vm652 = vcmask 1043456
        %v654 = vsel %vm652, %v599, 0
        %v657 = vsel %vm652, %v601, 0
        %659 = vmatprep.subr.bf16.mxu0 0
        %660 = vmatpush1.bf16.msra.mxu0 0
        %661 = vmatprep.subr.bf16.mxu0 0
        %662 = vmatpush1.bf16.msra.mxu0 0
        %663 = vmatprep.subr.bf16.mxu0 0
        %664 = vmatpush1.bf16.msra.mxu0 0
        %665 = vmatprep.subr.bf16.mxu0 0
        %666 = vmatpush1.bf16.msra.mxu0 0
        %667 = vmatprep.subr.bf16.mxu0 0
        %668 = vmatpush1.bf16.msra.mxu0 0
        %669 = vmatprep.subr.bf16.mxu0 0
        %670 = vmatpush1.bf16.msra.mxu0 0
        %671 = vmatprep.subr.bf16.mxu0 0
        %672 = vmatpush1.bf16.msra.mxu0 0
        %673 = vmatprep.subr.bf16.mxu0 %v657
        %674 = vmatpush1.bf16.msra.mxu0 %v654
        %675 = vmatprep.subr.bf16.mxu0 0
        %676 = vmatpush2.bf16.msra.mxu0 0
        %677 = vmatprep.subr.bf16.mxu0 0
        %678 = vmatpush2.bf16.msra.mxu0 0
        %679 = vmatprep.subr.bf16.mxu0 0
        %680 = vmatpush2.bf16.msra.mxu0 0
        %681 = vmatprep.subr.bf16.mxu0 0
        %682 = vmatpush2.bf16.msra.mxu0 0
        %683 = vmatprep.subr.bf16.mxu0 0
        %684 = vmatpush2.bf16.msra.mxu0 0
        %685 = vmatprep.subr.bf16.mxu0 0
        %686 = vmatpush2.bf16.msra.mxu0 0
        %687 = vmatprep.subr.bf16.mxu0 0
        %688 = vmatpush2.bf16.msra.mxu0 0
        %689 = vmatprep.subr.bf16.mxu0 0
        %690 = vmatpush2.bf16.msra.mxu0 0
        %691 = vmatprep.mubr.bf16.mxu0 0
        %692 = vmatmul.mubr.bf16.gmra.mxu0 %v647
        %v693 = vpop.f32.mrf.mxu0
        %v694 = vadd.f32 %v618, %v693
        %v695 = vpop.f32.mrf.mxu0
        %v696 = vadd.f32 %v618, %v695
        %v697 = vpop.f32.mrf.mxu0
        %v698 = vadd.f32 %v623, %v697
        %v699 = vpop.f32.mrf.mxu0
        %v700 = vadd.f32 %v623, %v699
        %701 = vmatprep.mubr.bf16.mxu0 0
        %702 = vmatmul.mubr.bf16.gmra.mxu0 %v650
        %v703 = vpop.f32.mrf.mxu0
        %v704 = vadd.f32 %v628, %v703
        %v705 = vpop.f32.mrf.mxu0
        %v706 = vadd.f32 %v628, %v705
        %v707 = vpop.f32.mrf.mxu0
        %v708 = vadd.f32 %v633, %v707
        %v709 = vpop.f32.mrf.mxu0
        %v710 = vadd.f32 %v633, %v709
        %711 = vdwg.mxu0
        %v712 = vpack.c.bf16 %v698, %v694
        %v713 = vpack.c.bf16 %v700, %v696
        %v714 = vpack.c.bf16 %v708, %v704
        %v715 = vpack.c.bf16 %v710, %v706
        %v716 = vmul.bf16 %v712, %v712
        %v717 = vmul.bf16 %v713, %v713
        %v718 = vmul.bf16 %v714, %v714
        %v719 = vmul.bf16 %v715, %v715
        %v720 = vmul.bf16 %v712, %v716
        %v721 = vmul.bf16 %v713, %v717
        %v722 = vmul.bf16 %v714, %v718
        %v723 = vmul.bf16 %v715, %v719
        %v724 = vmul.bf16 %v720, 1027030327
        %v725 = vmul.bf16 %v721, 1027030327
        %v726 = vmul.bf16 %v722, 1027030327
        %v727 = vmul.bf16 %v723, 1027030327
        %v728 = vadd.bf16 %v712, %v724
        %v729 = vadd.bf16 %v713, %v725
        %v730 = vadd.bf16 %v714, %v726
        %v731 = vadd.bf16 %v715, %v727
        %v732 = vmul.bf16 %v728, 1061961548
        %v733 = vmul.bf16 %v729, 1061961548
        %v734 = vmul.bf16 %v730, 1061961548
        %v735 = vmul.bf16 %v731, 1061961548
        %v736 = vtanh.bf16.pop %v732
        %v737 = vtanh.bf16.pop %v733
        %v738 = vtanh.bf16.pop %v734
        %v739 = vtanh.bf16.pop %v735
        %v740 = vadd.bf16 %v736, 1065369472
        %v741 = vadd.bf16 %v737, 1065369472
        %v742 = vadd.bf16 %v738, 1065369472
        %v743 = vadd.bf16 %v739, 1065369472
        %v744 = vmul.bf16 %v740, 1056980736
        %v745 = vmul.bf16 %v741, 1056980736
        %v746 = vmul.bf16 %v742, 1056980736
        %v747 = vmul.bf16 %v743, 1056980736
        %v748 = vmul.bf16 %v712, %v744
        %v749 = vmul.bf16 %v713, %v745
        %v750 = vmul.bf16 %v714, %v746
        %v751 = vmul.bf16 %v715, %v747
        %s752 = smul.addr %s33, 4
        %s753 = scalar_lea.vmem %s5, %s752
        %v754 = vld [vmem:[%s753] sm:$0xf]
        %s755 = smul.u32 %s33, 8
        %s756 = scalar_lea.vmem %s6, %s755
        %v757 = vld [vmem:[%s756] sm:$0xff]
        %759 = vset.pattern.permute.xlu0 0
        %760 = vperm.xlu0 %759, %v757
        %v761 = vpop.permute.xlu0 %760
        %vm763 = vcmask 261120
        %v765 = vsel %vm763, %v754, 0
        %767 = vmatprep.subr.bf16.mxu0 0
        %768 = vmatpush1.bf16.msra.mxu0 0
        %769 = vmatprep.subr.bf16.mxu0 0
        %770 = vmatpush1.bf16.msra.mxu0 0
        %771 = vmatprep.subr.bf16.mxu0 0
        %772 = vmatpush1.bf16.msra.mxu0 0
        %773 = vmatprep.subr.bf16.mxu0 0
        %774 = vmatpush1.bf16.msra.mxu0 0
        %775 = vmatprep.subr.bf16.mxu0 0
        %776 = vmatpush1.bf16.msra.mxu0 0
        %777 = vmatprep.subr.bf16.mxu0 0
        %778 = vmatpush1.bf16.msra.mxu0 0
        %779 = vmatprep.subr.bf16.mxu0 %v751
        %780 = vmatpush1.bf16.msra.mxu0 %v750
        %781 = vmatprep.subr.bf16.mxu0 %v749
        %782 = vmatpush1.bf16.msra.mxu0 %v748
        %783 = vmatprep.subr.bf16.mxu0 0
        %784 = vmatpush2.bf16.msra.mxu0 0
        %785 = vmatprep.subr.bf16.mxu0 0
        %786 = vmatpush2.bf16.msra.mxu0 0
        %787 = vmatprep.subr.bf16.mxu0 0
        %788 = vmatpush2.bf16.msra.mxu0 0
        %789 = vmatprep.subr.bf16.mxu0 0
        %790 = vmatpush2.bf16.msra.mxu0 0
        %791 = vmatprep.subr.bf16.mxu0 0
        %792 = vmatpush2.bf16.msra.mxu0 0
        %793 = vmatprep.subr.bf16.mxu0 0
        %794 = vmatpush2.bf16.msra.mxu0 0
        %795 = vmatprep.subr.bf16.mxu0 0
        %796 = vmatpush2.bf16.msra.mxu0 0
        %797 = vmatprep.subr.bf16.mxu0 0
        %798 = vmatpush2.bf16.msra.mxu0 0
        %799 = vmatprep.mubr.bf16.mxu0 0
        %800 = vmatmul.mubr.bf16.gmra.mxu0 %v765
        %v801 = vpop.f32.mrf.mxu0
        %v802 = vadd.f32 %v761, %v801
        %v803 = vpop.f32.mrf.mxu0
        %v804 = vadd.f32 %v761, %v803
        %v805 = vpop.f32.mrf.mxu0
        %v806 = vpop.f32.mrf.mxu0
        %807 = vdwg.mxu0
        %v808 = vadd.f32 %v554, %v802
        %v809 = vadd.f32 %v555, %v804
        %s810 = scalar_lea.vmem %s7, %s33
        %v811 = vld [vmem:[%s810] sm:$0x1]
        %s812 = scalar_lea.vmem %s8, %s33
        %v813 = vld [vmem:[%s812] sm:$0x1]
        %814 = vadd.xlane.f32.xlu0 %v808
        %v815 = vpop.xlane.xlu0 %814
        %816 = vadd.xlane.f32.xlu0 %v809
        %v817 = vpop.xlane.xlu0 %816
        %v818 = vmul.f32 %v815, %v564
        %v819 = vmul.f32 %v817, %v564
        %v820 = vsub.f32 %v808, %v818
        %v821 = vsub.f32 %v809, %v819
        %v822 = vmul.f32 %v820, %v820
        %v823 = vmul.f32 %v821, %v821
        %824 = vadd.xlane.f32.xlu0 %v822
        %v825 = vpop.xlane.xlu0 %824
        %826 = vadd.xlane.f32.xlu0 %v823
        %v827 = vpop.xlane.xlu0 %826
        %v828 = vmul.f32 %v825, %v564
        %v829 = vmul.f32 %v827, %v564
        %v830 = vadd.f32 %v828, 1e-05
        %v831 = vadd.f32 %v829, 1e-05
        %v832 = vrsqrt.pop %v830
        %v833 = vrsqrt.pop %v831
        %v834 = vmul.f32 %v820, %v832
        %v835 = vmul.f32 %v821, %v833
        %v837 = vlaneseq
        %v838 = vshrl.u32 %v837, 7
        %v839 = vsub.s32 0, %v838
        %v840 = vrot.slane %v811, %v839
        %v842 = vmul.f32 %v834, %v840
        %v843 = vmul.f32 %v835, %v840
        %v845 = vlaneseq
        %v846 = vshrl.u32 %v845, 7
        %v847 = vsub.s32 0, %v846
        %v848 = vrot.slane %v813, %v847
        %v850 = vadd.f32 %v842, %v848
        %v851 = vadd.f32 %v843, %v848
        %v852 = vpack.c.bf16 %v851, %v850
        %v853 = vld [vmem:[%s485] sm:$0xff]
        %v854 = vld [vmem:[%s485 + $0x8] sm:$0xff]
        %v855 = vld [vmem:[%s485 + $0x10] sm:$0xff]
        %v856 = vld [vmem:[%s485 + $0x18] sm:$0xff]
        %v857 = vld [vmem:[%s485 + $0x20] sm:$0xff]
        %v858 = vld [vmem:[%s485 + $0x28] sm:$0xff]
        %v859 = vld [vmem:[%s485 + $0x30] sm:$0xff]
        %v860 = vld [vmem:[%s485 + $0x38] sm:$0xff]
        %v861 = vld [vmem:[%s485 + $0x40] sm:$0xff]
        %v862 = vld [vmem:[%s485 + $0x48] sm:$0xff]
        %v863 = vld [vmem:[%s485 + $0x50] sm:$0xff]
        %v864 = vld [vmem:[%s485 + $0x58] sm:$0xff]
        %v865 = vld [vmem:[%s485 + $0x60] sm:$0xff]
        %v866 = vld [vmem:[%s485 + $0x68] sm:$0xff]
        %v867 = vld [vmem:[%s485 + $0x70] sm:$0xff]
        %v868 = vld [vmem:[%s485 + $0x78] sm:$0xff]
        %v869 = vld [vmem:[%s485 + $0x80] sm:$0xff]
        %v870 = vld [vmem:[%s485 + $0x88] sm:$0xff]
        %v871 = vld [vmem:[%s485 + $0x90] sm:$0xff]
        %v872 = vld [vmem:[%s485 + $0x98] sm:$0xff]
        %v873 = vld [vmem:[%s485 + $0xa0] sm:$0xff]
        %v874 = vld [vmem:[%s485 + $0xa8] sm:$0xff]
        %v875 = vld [vmem:[%s485 + $0xb0] sm:$0xff]
        %v876 = vld [vmem:[%s485 + $0xb8] sm:$0xff]
        %v877 = vld [vmem:[%s485 + $0xc0] sm:$0xff]
        %v878 = vld [vmem:[%s485 + $0xc8] sm:$0xff]
        %v879 = vld [vmem:[%s485 + $0xd0] sm:$0xff]
        %v880 = vld [vmem:[%s485 + $0xd8] sm:$0xff]
        %v881 = vld [vmem:[%s485 + $0xe0] sm:$0xff]
        %v882 = vld [vmem:[%s485 + $0xe8] sm:$0xff]
        %v883 = vld [vmem:[%s485 + $0xf0] sm:$0xff]
        %v884 = vld [vmem:[%s485 + $0xf8] sm:$0xff]
        %s885 = scalar_lea.vmem %s10, %s602
        %v886 = vld [vmem:[%s885] sm:$0xf]
        %v888 = vlaneseq
        %v889 = vshrl.u32 %v888, 7
        %v890 = vsub.s32 0, %v889
        %v891 = vrot.slane %v886, %v890
        %v892 = vlaneseq
        %v893 = vshrl.u32 %v892, 7
        %v894 = vsub.s32 1, %v893
        %v895 = vrot.slane %v886, %v894
        %v896 = vlaneseq
        %v897 = vshrl.u32 %v896, 7
        %v898 = vsub.s32 2, %v897
        %v899 = vrot.slane %v886, %v898
        %v900 = vlaneseq
        %v901 = vshrl.u32 %v900, 7
        %v902 = vsub.s32 3, %v901
        %v903 = vrot.slane %v886, %v902
        %v940 = vunpack.c.l.b16 %v853
        %v941 = vunpack.c.h.b16 %v853
        %v942 = vunpack.c.l.b16 %v854
        %v943 = vunpack.c.h.b16 %v854
        %v944 = vunpack.c.l.b16 %v855
        %v945 = vunpack.c.h.b16 %v855
        %v946 = vunpack.c.l.b16 %v856
        %v947 = vunpack.c.h.b16 %v856
        %v948 = vunpack.c.l.b16 %v857
        %v949 = vunpack.c.h.b16 %v857
        %v950 = vunpack.c.l.b16 %v858
        %v951 = vunpack.c.h.b16 %v858
        %v952 = vunpack.c.l.b16 %v859
        %v953 = vunpack.c.h.b16 %v859
        %v954 = vunpack.c.l.b16 %v860
        %v955 = vunpack.c.h.b16 %v860
        %v956 = vunpack.c.l.b16 %v861
        %v957 = vunpack.c.h.b16 %v861
        %v958 = vunpack.c.l.b16 %v862
        %v959 = vunpack.c.h.b16 %v862
        %v960 = vunpack.c.l.b16 %v863
        %v961 = vunpack.c.h.b16 %v863
        %v962 = vunpack.c.l.b16 %v864
        %v963 = vunpack.c.h.b16 %v864
        %v964 = vunpack.c.l.b16 %v865
        %v965 = vunpack.c.h.b16 %v865
        %v966 = vunpack.c.l.b16 %v866
        %v967 = vunpack.c.h.b16 %v866
        %v968 = vunpack.c.l.b16 %v867
        %v969 = vunpack.c.h.b16 %v867
        %v970 = vunpack.c.l.b16 %v868
        %v971 = vunpack.c.h.b16 %v868
        %v972 = vunpack.c.l.b16 %v869
        %v973 = vunpack.c.h.b16 %v869
        %v974 = vunpack.c.l.b16 %v870
        %v975 = vunpack.c.h.b16 %v870
        %v976 = vunpack.c.l.b16 %v871
        %v977 = vunpack.c.h.b16 %v871
        %v978 = vunpack.c.l.b16 %v872
        %v979 = vunpack.c.h.b16 %v872
        %v980 = vunpack.c.l.b16 %v873
        %v981 = vunpack.c.h.b16 %v873
        %v982 = vunpack.c.l.b16 %v874
        %v983 = vunpack.c.h.b16 %v874
        %v984 = vunpack.c.l.b16 %v875
        %v985 = vunpack.c.h.b16 %v875
        %v986 = vunpack.c.l.b16 %v876
        %v987 = vunpack.c.h.b16 %v876
        %v988 = vunpack.c.l.b16 %v877
        %v989 = vunpack.c.h.b16 %v877
        %v990 = vunpack.c.l.b16 %v878
        %v991 = vunpack.c.h.b16 %v878
        %v992 = vunpack.c.l.b16 %v879
        %v993 = vunpack.c.h.b16 %v879
        %v994 = vunpack.c.l.b16 %v880
        %v995 = vunpack.c.h.b16 %v880
        %v996 = vunpack.c.l.b16 %v881
        %v997 = vunpack.c.h.b16 %v881
        %v998 = vunpack.c.l.b16 %v882
        %v999 = vunpack.c.h.b16 %v882
        %v1000 = vunpack.c.l.b16 %v883
        %v1001 = vunpack.c.h.b16 %v883
        %v1002 = vunpack.c.l.b16 %v884
        %v1003 = vunpack.c.h.b16 %v884
        %v1004 = vpack.c.b16 %v944, %v940
        %v1005 = vpack.c.b16 %v945, %v941
        %v1006 = vpack.c.b16 %v946, %v942
        %v1007 = vpack.c.b16 %v947, %v943
        %v1008 = vpack.c.b16 %v952, %v948
        %v1009 = vpack.c.b16 %v953, %v949
        %v1010 = vpack.c.b16 %v954, %v950
        %v1011 = vpack.c.b16 %v955, %v951
        %v1012 = vpack.c.b16 %v960, %v956
        %v1013 = vpack.c.b16 %v961, %v957
        %v1014 = vpack.c.b16 %v962, %v958
        %v1015 = vpack.c.b16 %v963, %v959
        %v1016 = vpack.c.b16 %v968, %v964
        %v1017 = vpack.c.b16 %v969, %v965
        %v1018 = vpack.c.b16 %v970, %v966
        %v1019 = vpack.c.b16 %v971, %v967
        %v1020 = vpack.c.b16 %v976, %v972
        %v1021 = vpack.c.b16 %v977, %v973
        %v1022 = vpack.c.b16 %v978, %v974
        %v1023 = vpack.c.b16 %v979, %v975
        %v1024 = vpack.c.b16 %v984, %v980
        %v1025 = vpack.c.b16 %v985, %v981
        %v1026 = vpack.c.b16 %v986, %v982
        %v1027 = vpack.c.b16 %v987, %v983
        %v1028 = vpack.c.b16 %v992, %v988
        %v1029 = vpack.c.b16 %v993, %v989
        %v1030 = vpack.c.b16 %v994, %v990
        %v1031 = vpack.c.b16 %v995, %v991
        %v1032 = vpack.c.b16 %v1000, %v996
        %v1033 = vpack.c.b16 %v1001, %v997
        %v1034 = vpack.c.b16 %v1002, %v998
        %v1035 = vpack.c.b16 %v1003, %v999
        %1068 = vmatprep.subr.bf16.mxu0 %v1033
        %1069 = vmatpush1.bf16.msra.mxu0 %v1032
        %1070 = vmatprep.subr.bf16.mxu0 %v1029
        %1071 = vmatpush1.bf16.msra.mxu0 %v1028
        %1072 = vmatprep.subr.bf16.mxu0 %v1025
        %1073 = vmatpush1.bf16.msra.mxu0 %v1024
        %1074 = vmatprep.subr.bf16.mxu0 %v1021
        %1075 = vmatpush1.bf16.msra.mxu0 %v1020
        %1076 = vmatprep.subr.bf16.mxu0 %v1017
        %1077 = vmatpush1.bf16.msra.mxu0 %v1016
        %1078 = vmatprep.subr.bf16.mxu0 %v1013
        %1079 = vmatpush1.bf16.msra.mxu0 %v1012
        %1080 = vmatprep.subr.bf16.mxu0 %v1009
        %1081 = vmatpush1.bf16.msra.mxu0 %v1008
        %1082 = vmatprep.subr.bf16.mxu0 %v1005
        %1083 = vmatpush1.bf16.msra.mxu0 %v1004
        %1084 = vmatprep.subr.bf16.mxu0 0
        %1085 = vmatpush2.bf16.msra.mxu0 0
        %1086 = vmatprep.subr.bf16.mxu0 0
        %1087 = vmatpush2.bf16.msra.mxu0 0
        %1088 = vmatprep.subr.bf16.mxu0 0
        %1089 = vmatpush2.bf16.msra.mxu0 0
        %1090 = vmatprep.subr.bf16.mxu0 0
        %1091 = vmatpush2.bf16.msra.mxu0 0
        %1092 = vmatprep.subr.bf16.mxu0 0
        %1093 = vmatpush2.bf16.msra.mxu0 0
        %1094 = vmatprep.subr.bf16.mxu0 0
        %1095 = vmatpush2.bf16.msra.mxu0 0
        %1096 = vmatprep.subr.bf16.mxu0 0
        %1097 = vmatpush2.bf16.msra.mxu0 0
        %1098 = vmatprep.subr.bf16.mxu0 0
        %1099 = vmatpush2.bf16.msra.mxu0 0
        %1100 = vmatprep.mubr.bf16.mxu0 0
        %1101 = vmatmul.mubr.bf16.gmra.mxu0 %v852
        %v1102 = vpop.f32.mrf.mxu0
        %v1103 = vadd.f32 %v891, %v1102
        %v1104 = vpop.f32.mrf.mxu0
        %v1105 = vadd.f32 %v895, %v1104
        %v1106 = vpop.f32.mrf.mxu0
        %v1107 = vadd.f32 %v891, %v1106
        %v1108 = vpop.f32.mrf.mxu0
        %v1109 = vadd.f32 %v895, %v1108
        %1110 = vdwg.mxu0
        %1111 = vmatprep.subr.bf16.mxu0 %v1035
        %1112 = vmatpush1.bf16.msra.mxu0 %v1034
        %1113 = vmatprep.subr.bf16.mxu0 %v1031
        %1114 = vmatpush1.bf16.msra.mxu0 %v1030
        %1115 = vmatprep.subr.bf16.mxu0 %v1027
        %1116 = vmatpush1.bf16.msra.mxu0 %v1026
        %1117 = vmatprep.subr.bf16.mxu0 %v1023
        %1118 = vmatpush1.bf16.msra.mxu0 %v1022
        %1119 = vmatprep.subr.bf16.mxu0 %v1019
        %1120 = vmatpush1.bf16.msra.mxu0 %v1018
        %1121 = vmatprep.subr.bf16.mxu0 %v1015
        %1122 = vmatpush1.bf16.msra.mxu0 %v1014
        %1123 = vmatprep.subr.bf16.mxu0 %v1011
        %1124 = vmatpush1.bf16.msra.mxu0 %v1010
        %1125 = vmatprep.subr.bf16.mxu0 %v1007
        %1126 = vmatpush1.bf16.msra.mxu0 %v1006
        %1127 = vmatprep.subr.bf16.mxu0 0
        %1128 = vmatpush2.bf16.msra.mxu0 0
        %1129 = vmatprep.subr.bf16.mxu0 0
        %1130 = vmatpush2.bf16.msra.mxu0 0
        %1131 = vmatprep.subr.bf16.mxu0 0
        %1132 = vmatpush2.bf16.msra.mxu0 0
        %1133 = vmatprep.subr.bf16.mxu0 0
        %1134 = vmatpush2.bf16.msra.mxu0 0
        %1135 = vmatprep.subr.bf16.mxu0 0
        %1136 = vmatpush2.bf16.msra.mxu0 0
        %1137 = vmatprep.subr.bf16.mxu0 0
        %1138 = vmatpush2.bf16.msra.mxu0 0
        %1139 = vmatprep.subr.bf16.mxu0 0
        %1140 = vmatpush2.bf16.msra.mxu0 0
        %1141 = vmatprep.subr.bf16.mxu0 0
        %1142 = vmatpush2.bf16.msra.mxu0 0
        %1143 = vmatprep.mubr.bf16.mxu0 0
        %1144 = vmatmul.mubr.bf16.gmra.mxu0 %v852
        %v1145 = vpop.f32.mrf.mxu0
        %v1146 = vadd.f32 %v899, %v1145
        %v1147 = vpop.f32.mrf.mxu0
        %v1148 = vadd.f32 %v903, %v1147
        %v1149 = vpop.f32.mrf.mxu0
        %v1150 = vadd.f32 %v899, %v1149
        %v1151 = vpop.f32.mrf.mxu0
        %v1152 = vadd.f32 %v903, %v1151
        %1153 = vdwg.mxu0
        %v1154 = vpack.c.bf16 %v1107, %v1103
        %v1155 = vpack.c.bf16 %v1109, %v1105
        %v1156 = vpack.c.bf16 %v1150, %v1146
        %v1157 = vpack.c.bf16 %v1152, %v1148
        %v1158 = vmul.bf16 %v1154, %v1154
        %v1159 = vmul.bf16 %v1155, %v1155
        %v1160 = vmul.bf16 %v1156, %v1156
        %v1161 = vmul.bf16 %v1157, %v1157
        %v1162 = vmul.bf16 %v1154, %v1158
        %v1163 = vmul.bf16 %v1155, %v1159
        %v1164 = vmul.bf16 %v1156, %v1160
        %v1165 = vmul.bf16 %v1157, %v1161
        %v1166 = vmul.bf16 %v1162, 1027030327
        %v1167 = vmul.bf16 %v1163, 1027030327
        %v1168 = vmul.bf16 %v1164, 1027030327
        %v1169 = vmul.bf16 %v1165, 1027030327
        %v1170 = vadd.bf16 %v1154, %v1166
        %v1171 = vadd.bf16 %v1155, %v1167
        %v1172 = vadd.bf16 %v1156, %v1168
        %v1173 = vadd.bf16 %v1157, %v1169
        %v1174 = vmul.bf16 %v1170, 1061961548
        %v1175 = vmul.bf16 %v1171, 1061961548
        %v1176 = vmul.bf16 %v1172, 1061961548
        %v1177 = vmul.bf16 %v1173, 1061961548
        %v1178 = vtanh.bf16.pop %v1174
        %v1179 = vtanh.bf16.pop %v1175
        %v1180 = vtanh.bf16.pop %v1176
        %v1181 = vtanh.bf16.pop %v1177
        %v1182 = vadd.bf16 %v1178, 1065369472
        %v1183 = vadd.bf16 %v1179, 1065369472
        %v1184 = vadd.bf16 %v1180, 1065369472
        %v1185 = vadd.bf16 %v1181, 1065369472
        %v1186 = vmul.bf16 %v1182, 1056980736
        %v1187 = vmul.bf16 %v1183, 1056980736
        %v1188 = vmul.bf16 %v1184, 1056980736
        %v1189 = vmul.bf16 %v1185, 1056980736
        %v1190 = vmul.bf16 %v1154, %v1186
        %v1191 = vmul.bf16 %v1155, %v1187
        %v1192 = vmul.bf16 %v1156, %v1188
        %v1193 = vmul.bf16 %v1157, %v1189
        %v1194 = vld [vmem:[%s494] sm:$0xf]
        %v1195 = vld [vmem:[%s494 + $0x4] sm:$0xf]
        %v1196 = vld [vmem:[%s494 + $0x8] sm:$0xf]
        %v1197 = vld [vmem:[%s494 + $0xc] sm:$0xf]
        %v1198 = vld [vmem:[%s494 + $0x10] sm:$0xf]
        %v1199 = vld [vmem:[%s494 + $0x14] sm:$0xf]
        %v1200 = vld [vmem:[%s494 + $0x18] sm:$0xf]
        %v1201 = vld [vmem:[%s494 + $0x1c] sm:$0xf]
        %v1202 = vld [vmem:[%s494 + $0x20] sm:$0xf]
        %v1203 = vld [vmem:[%s494 + $0x24] sm:$0xf]
        %v1204 = vld [vmem:[%s494 + $0x28] sm:$0xf]
        %v1205 = vld [vmem:[%s494 + $0x2c] sm:$0xf]
        %v1206 = vld [vmem:[%s494 + $0x30] sm:$0xf]
        %v1207 = vld [vmem:[%s494 + $0x34] sm:$0xf]
        %v1208 = vld [vmem:[%s494 + $0x38] sm:$0xf]
        %v1209 = vld [vmem:[%s494 + $0x3c] sm:$0xf]
        %v1210 = vld [vmem:[%s494 + $0x40] sm:$0xf]
        %v1211 = vld [vmem:[%s494 + $0x44] sm:$0xf]
        %v1212 = vld [vmem:[%s494 + $0x48] sm:$0xf]
        %v1213 = vld [vmem:[%s494 + $0x4c] sm:$0xf]
        %v1214 = vld [vmem:[%s494 + $0x50] sm:$0xf]
        %v1215 = vld [vmem:[%s494 + $0x54] sm:$0xf]
        %v1216 = vld [vmem:[%s494 + $0x58] sm:$0xf]
        %v1217 = vld [vmem:[%s494 + $0x5c] sm:$0xf]
        %v1218 = vld [vmem:[%s494 + $0x60] sm:$0xf]
        %v1219 = vld [vmem:[%s494 + $0x64] sm:$0xf]
        %v1220 = vld [vmem:[%s494 + $0x68] sm:$0xf]
        %v1221 = vld [vmem:[%s494 + $0x6c] sm:$0xf]
        %v1222 = vld [vmem:[%s494 + $0x70] sm:$0xf]
        %v1223 = vld [vmem:[%s494 + $0x74] sm:$0xf]
        %v1224 = vld [vmem:[%s494 + $0x78] sm:$0xf]
        %v1225 = vld [vmem:[%s494 + $0x7c] sm:$0xf]
        %v1226 = vld [vmem:[%s494 + $0x80] sm:$0xf]
        %v1227 = vld [vmem:[%s494 + $0x84] sm:$0xf]
        %v1228 = vld [vmem:[%s494 + $0x88] sm:$0xf]
        %v1229 = vld [vmem:[%s494 + $0x8c] sm:$0xf]
        %v1230 = vld [vmem:[%s494 + $0x90] sm:$0xf]
        %v1231 = vld [vmem:[%s494 + $0x94] sm:$0xf]
        %v1232 = vld [vmem:[%s494 + $0x98] sm:$0xf]
        %v1233 = vld [vmem:[%s494 + $0x9c] sm:$0xf]
        %v1234 = vld [vmem:[%s494 + $0xa0] sm:$0xf]
        %v1235 = vld [vmem:[%s494 + $0xa4] sm:$0xf]
        %v1236 = vld [vmem:[%s494 + $0xa8] sm:$0xf]
        %v1237 = vld [vmem:[%s494 + $0xac] sm:$0xf]
        %v1238 = vld [vmem:[%s494 + $0xb0] sm:$0xf]
        %v1239 = vld [vmem:[%s494 + $0xb4] sm:$0xf]
        %v1240 = vld [vmem:[%s494 + $0xb8] sm:$0xf]
        %v1241 = vld [vmem:[%s494 + $0xbc] sm:$0xf]
        %v1242 = vld [vmem:[%s494 + $0xc0] sm:$0xf]
        %v1243 = vld [vmem:[%s494 + $0xc4] sm:$0xf]
        %v1244 = vld [vmem:[%s494 + $0xc8] sm:$0xf]
        %v1245 = vld [vmem:[%s494 + $0xcc] sm:$0xf]
        %v1246 = vld [vmem:[%s494 + $0xd0] sm:$0xf]
        %v1247 = vld [vmem:[%s494 + $0xd4] sm:$0xf]
        %v1248 = vld [vmem:[%s494 + $0xd8] sm:$0xf]
        %v1249 = vld [vmem:[%s494 + $0xdc] sm:$0xf]
        %v1250 = vld [vmem:[%s494 + $0xe0] sm:$0xf]
        %v1251 = vld [vmem:[%s494 + $0xe4] sm:$0xf]
        %v1252 = vld [vmem:[%s494 + $0xe8] sm:$0xf]
        %v1253 = vld [vmem:[%s494 + $0xec] sm:$0xf]
        %v1254 = vld [vmem:[%s494 + $0xf0] sm:$0xf]
        %v1255 = vld [vmem:[%s494 + $0xf4] sm:$0xf]
        %v1256 = vld [vmem:[%s494 + $0xf8] sm:$0xf]
        %v1257 = vld [vmem:[%s494 + $0xfc] sm:$0xf]
        %s1258 = scalar_lea.vmem %s12, %s33
        %v1259 = vld [vmem:[%s1258] sm:$0x1]
        %v1261 = vlaneseq
        %v1262 = vshrl.u32 %v1261, 7
        %v1263 = vsub.s32 0, %v1262
        %v1264 = vrot.slane %v1259, %v1263
        %v1330 = vunpack.c.l.b16 %v1194
        %v1331 = vunpack.c.l.b16 %v1195
        %v1332 = vunpack.c.l.b16 %v1196
        %v1333 = vunpack.c.l.b16 %v1197
        %v1334 = vunpack.c.l.b16 %v1198
        %v1335 = vunpack.c.l.b16 %v1199
        %v1336 = vunpack.c.l.b16 %v1200
        %v1337 = vunpack.c.l.b16 %v1201
        %v1338 = vunpack.c.l.b16 %v1202
        %v1339 = vunpack.c.l.b16 %v1203
        %v1340 = vunpack.c.l.b16 %v1204
        %v1341 = vunpack.c.l.b16 %v1205
        %v1342 = vunpack.c.l.b16 %v1206
        %v1343 = vunpack.c.l.b16 %v1207
        %v1344 = vunpack.c.l.b16 %v1208
        %v1345 = vunpack.c.l.b16 %v1209
        %v1346 = vunpack.c.l.b16 %v1210
        %v1347 = vunpack.c.l.b16 %v1211
        %v1348 = vunpack.c.l.b16 %v1212
        %v1349 = vunpack.c.l.b16 %v1213
        %v1350 = vunpack.c.l.b16 %v1214
        %v1351 = vunpack.c.l.b16 %v1215
        %v1352 = vunpack.c.l.b16 %v1216
        %v1353 = vunpack.c.l.b16 %v1217
        %v1354 = vunpack.c.l.b16 %v1218
        %v1355 = vunpack.c.l.b16 %v1219
        %v1356 = vunpack.c.l.b16 %v1220
        %v1357 = vunpack.c.l.b16 %v1221
        %v1358 = vunpack.c.l.b16 %v1222
        %v1359 = vunpack.c.l.b16 %v1223
        %v1360 = vunpack.c.l.b16 %v1224
        %v1361 = vunpack.c.l.b16 %v1225
        %v1362 = vunpack.c.l.b16 %v1226
        %v1363 = vunpack.c.l.b16 %v1227
        %v1364 = vunpack.c.l.b16 %v1228
        %v1365 = vunpack.c.l.b16 %v1229
        %v1366 = vunpack.c.l.b16 %v1230
        %v1367 = vunpack.c.l.b16 %v1231
        %v1368 = vunpack.c.l.b16 %v1232
        %v1369 = vunpack.c.l.b16 %v1233
        %v1370 = vunpack.c.l.b16 %v1234
        %v1371 = vunpack.c.l.b16 %v1235
        %v1372 = vunpack.c.l.b16 %v1236
        %v1373 = vunpack.c.l.b16 %v1237
        %v1374 = vunpack.c.l.b16 %v1238
        %v1375 = vunpack.c.l.b16 %v1239
        %v1376 = vunpack.c.l.b16 %v1240
        %v1377 = vunpack.c.l.b16 %v1241
        %v1378 = vunpack.c.l.b16 %v1242
        %v1379 = vunpack.c.l.b16 %v1243
        %v1380 = vunpack.c.l.b16 %v1244
        %v1381 = vunpack.c.l.b16 %v1245
        %v1382 = vunpack.c.l.b16 %v1246
        %v1383 = vunpack.c.l.b16 %v1247
        %v1384 = vunpack.c.l.b16 %v1248
        %v1385 = vunpack.c.l.b16 %v1249
        %v1386 = vunpack.c.l.b16 %v1250
        %v1387 = vunpack.c.l.b16 %v1251
        %v1388 = vunpack.c.l.b16 %v1252
        %v1389 = vunpack.c.l.b16 %v1253
        %v1390 = vunpack.c.l.b16 %v1254
        %v1391 = vunpack.c.l.b16 %v1255
        %v1392 = vunpack.c.l.b16 %v1256
        %v1393 = vunpack.c.l.b16 %v1257
        %v1394 = vpack.c.b16 %v1331, %v1330
        %v1395 = vpack.c.b16 %v1333, %v1332
        %v1396 = vpack.c.b16 %v1335, %v1334
        %v1397 = vpack.c.b16 %v1337, %v1336
        %v1398 = vpack.c.b16 %v1339, %v1338
        %v1399 = vpack.c.b16 %v1341, %v1340
        %v1400 = vpack.c.b16 %v1343, %v1342
        %v1401 = vpack.c.b16 %v1345, %v1344
        %v1402 = vpack.c.b16 %v1347, %v1346
        %v1403 = vpack.c.b16 %v1349, %v1348
        %v1404 = vpack.c.b16 %v1351, %v1350
        %v1405 = vpack.c.b16 %v1353, %v1352
        %v1406 = vpack.c.b16 %v1355, %v1354
        %v1407 = vpack.c.b16 %v1357, %v1356
        %v1408 = vpack.c.b16 %v1359, %v1358
        %v1409 = vpack.c.b16 %v1361, %v1360
        %v1410 = vpack.c.b16 %v1363, %v1362
        %v1411 = vpack.c.b16 %v1365, %v1364
        %v1412 = vpack.c.b16 %v1367, %v1366
        %v1413 = vpack.c.b16 %v1369, %v1368
        %v1414 = vpack.c.b16 %v1371, %v1370
        %v1415 = vpack.c.b16 %v1373, %v1372
        %v1416 = vpack.c.b16 %v1375, %v1374
        %v1417 = vpack.c.b16 %v1377, %v1376
        %v1418 = vpack.c.b16 %v1379, %v1378
        %v1419 = vpack.c.b16 %v1381, %v1380
        %v1420 = vpack.c.b16 %v1383, %v1382
        %v1421 = vpack.c.b16 %v1385, %v1384
        %v1422 = vpack.c.b16 %v1387, %v1386
        %v1423 = vpack.c.b16 %v1389, %v1388
        %v1424 = vpack.c.b16 %v1391, %v1390
        %v1425 = vpack.c.b16 %v1393, %v1392
        %1458 = vmatprep.subr.bf16.mxu0 0
        %1459 = vmatpush1.bf16.msra.mxu0 %v1401
        %1460 = vmatprep.subr.bf16.mxu0 0
        %1461 = vmatpush1.bf16.msra.mxu0 %v1400
        %1462 = vmatprep.subr.bf16.mxu0 0
        %1463 = vmatpush1.bf16.msra.mxu0 %v1399
        %1464 = vmatprep.subr.bf16.mxu0 0
        %1465 = vmatpush1.bf16.msra.mxu0 %v1398
        %1466 = vmatprep.subr.bf16.mxu0 0
        %1467 = vmatpush1.bf16.msra.mxu0 %v1397
        %1468 = vmatprep.subr.bf16.mxu0 0
        %1469 = vmatpush1.bf16.msra.mxu0 %v1396
        %1470 = vmatprep.subr.bf16.mxu0 0
        %1471 = vmatpush1.bf16.msra.mxu0 %v1395
        %1472 = vmatprep.subr.bf16.mxu0 0
        %1473 = vmatpush1.bf16.msra.mxu0 %v1394
        %1474 = vmatprep.subr.bf16.mxu0 0
        %1475 = vmatpush2.bf16.msra.mxu0 %v1409
        %1476 = vmatprep.subr.bf16.mxu0 0
        %1477 = vmatpush2.bf16.msra.mxu0 %v1408
        %1478 = vmatprep.subr.bf16.mxu0 0
        %1479 = vmatpush2.bf16.msra.mxu0 %v1407
        %1480 = vmatprep.subr.bf16.mxu0 0
        %1481 = vmatpush2.bf16.msra.mxu0 %v1406
        %1482 = vmatprep.subr.bf16.mxu0 0
        %1483 = vmatpush2.bf16.msra.mxu0 %v1405
        %1484 = vmatprep.subr.bf16.mxu0 0
        %1485 = vmatpush2.bf16.msra.mxu0 %v1404
        %1486 = vmatprep.subr.bf16.mxu0 0
        %1487 = vmatpush2.bf16.msra.mxu0 %v1403
        %1488 = vmatprep.subr.bf16.mxu0 0
        %1489 = vmatpush2.bf16.msra.mxu0 %v1402
        %1490 = vmatprep.mubr.bf16.mxu0 %v1191
        %1491 = vmatmul.mubr.bf16.gmra.mxu0 %v1190
        %v1492 = vpop.f32.mrf.mxu0
        %v1493 = vadd.f32 %v1264, %v1492
        %v1494 = vpop.f32.mrf.mxu0
        %v1495 = vpop.f32.mrf.mxu0
        %v1496 = vadd.f32 %v1264, %v1495
        %v1497 = vpop.f32.mrf.mxu0
        %1498 = vdwg.mxu0
        %1499 = vmatprep.subr.bf16.mxu0 0
        %1500 = vmatpush1.bf16.msra.mxu0 %v1417
        %1501 = vmatprep.subr.bf16.mxu0 0
        %1502 = vmatpush1.bf16.msra.mxu0 %v1416
        %1503 = vmatprep.subr.bf16.mxu0 0
        %1504 = vmatpush1.bf16.msra.mxu0 %v1415
        %1505 = vmatprep.subr.bf16.mxu0 0
        %1506 = vmatpush1.bf16.msra.mxu0 %v1414
        %1507 = vmatprep.subr.bf16.mxu0 0
        %1508 = vmatpush1.bf16.msra.mxu0 %v1413
        %1509 = vmatprep.subr.bf16.mxu0 0
        %1510 = vmatpush1.bf16.msra.mxu0 %v1412
        %1511 = vmatprep.subr.bf16.mxu0 0
        %1512 = vmatpush1.bf16.msra.mxu0 %v1411
        %1513 = vmatprep.subr.bf16.mxu0 0
        %1514 = vmatpush1.bf16.msra.mxu0 %v1410
        %1515 = vmatprep.subr.bf16.mxu0 0
        %1516 = vmatpush2.bf16.msra.mxu0 %v1425
        %1517 = vmatprep.subr.bf16.mxu0 0
        %1518 = vmatpush2.bf16.msra.mxu0 %v1424
        %1519 = vmatprep.subr.bf16.mxu0 0
        %1520 = vmatpush2.bf16.msra.mxu0 %v1423
        %1521 = vmatprep.subr.bf16.mxu0 0
        %1522 = vmatpush2.bf16.msra.mxu0 %v1422
        %1523 = vmatprep.subr.bf16.mxu0 0
        %1524 = vmatpush2.bf16.msra.mxu0 %v1421
        %1525 = vmatprep.subr.bf16.mxu0 0
        %1526 = vmatpush2.bf16.msra.mxu0 %v1420
        %1527 = vmatprep.subr.bf16.mxu0 0
        %1528 = vmatpush2.bf16.msra.mxu0 %v1419
        %1529 = vmatprep.subr.bf16.mxu0 0
        %1530 = vmatpush2.bf16.msra.mxu0 %v1418
        %1531 = vmatprep.mubr.bf16.mxu0 %v1193
        %1532 = vmatmul.mubr.bf16.gmra.mxu0 %v1192
        %v1533 = vpop.f32.mrf.mxu0
        %v1534 = vadd.f32 %v1493, %v1533
        %v1535 = vpop.f32.mrf.mxu0
        %v1536 = vpop.f32.mrf.mxu0
        %v1537 = vadd.f32 %v1496, %v1536
        %v1538 = vpop.f32.mrf.mxu0
        %1539 = vdwg.mxu0
        %v1540 = vadd.f32 %v808, %v1534
        %v1541 = vadd.f32 %v809, %v1537
        %1542 = vst [vmem:[#allocation7] sm:$0xff] %v1540
        %1543 = vst [vmem:[#allocation7 + $0x8] sm:$0xff] %v1541
        %p1544 = scmp.eq.s32.totalorder %s33, 2
        // Predicated region
        $region93: #{tpu_custom_call.1} parent=79 // pred_check
          %p1545 = pneg %p1544
        $region94: #{tpu_custom_call.1} parent=79 // pred_check_branch
          %1547 = sbr.rel (%p1545) target = $region96
        $region95: #{tpu_custom_call.1} parent=79 // pred_region
          %v1548 = vld [vmem:[%s13] sm:$0x1]
          %v1549 = vld [vmem:[%s14] sm:$0x1]
          %1550 = vadd.xlane.f32.xlu0 %v1540
          %v1551 = vpop.xlane.xlu0 %1550
          %1552 = vadd.xlane.f32.xlu0 %v1541
          %v1553 = vpop.xlane.xlu0 %1552
          %v1554 = vmul.f32 %v1551, %v564
          %v1555 = vmul.f32 %v1553, %v564
          %v1556 = vsub.f32 %v1540, %v1554
          %v1557 = vsub.f32 %v1541, %v1555
          %v1558 = vmul.f32 %v1556, %v1556
          %v1559 = vmul.f32 %v1557, %v1557
          %1560 = vadd.xlane.f32.xlu0 %v1558
          %v1561 = vpop.xlane.xlu0 %1560
          %1562 = vadd.xlane.f32.xlu0 %v1559
          %v1563 = vpop.xlane.xlu0 %1562
          %v1564 = vmul.f32 %v1561, %v564
          %v1565 = vmul.f32 %v1563, %v564
          %v1566 = vadd.f32 %v1564, 1e-05
          %v1567 = vadd.f32 %v1565, 1e-05
          %v1568 = vrsqrt.pop %v1566
          %v1569 = vrsqrt.pop %v1567
          %v1570 = vmul.f32 %v1556, %v1568
          %v1571 = vmul.f32 %v1557, %v1569
          %v1573 = vlaneseq
          %v1574 = vshrl.u32 %v1573, 7
          %v1575 = vsub.s32 0, %v1574
          %v1576 = vrot.slane %v1548, %v1575
          %v1578 = vmul.f32 %v1570, %v1576
          %v1579 = vmul.f32 %v1571, %v1576
          %v1581 = vlaneseq
          %v1582 = vshrl.u32 %v1581, 7
          %v1583 = vsub.s32 0, %v1582
          %v1584 = vrot.slane %v1549, %v1583
          %v1586 = vadd.f32 %v1578, %v1584
          %v1587 = vadd.f32 %v1579, %v1584
          %1588 = vst [vmem:[#allocation7] sm:$0xff] %v1586
          %1589 = vst [vmem:[#allocation7 + $0x8] sm:$0xff] %v1587
        $region96: #{tpu_custom_call.1} parent=79 // pred_fallthru
          _
        // Predicated region
        $region97: #{tpu_custom_call.1} parent=79 // pred_check
          %p1590 = pneg %p371
        $region98: #{tpu_custom_call.1} parent=79 // pred_check_branch
          %1592 = sbr.rel (%p1590) target = $region100
        $region99: #{tpu_custom_call.1} parent=79 // pred_region
          %s1594 = ssub.s32 256, 256
          %1595 = vsyncadd [#allocation4], %s1594
          %s1596 = sshll.u32 [#allocation7], 4
          %s1597 = int_to_ptr.vmem [resolvable:$true] %s1596
          %1602 = dma.vmem_to_hbm [thread:$0]  %s1597, 256, %s15, [#allocation4], 128, 128, 8
        $region100: #{tpu_custom_call.1} parent=79 // pred_fallthru
          _
        // Predicated region
        $region101: #{tpu_custom_call.1} parent=79 // pred_check
          %p1603 = pneg %p371
        $region102: #{tpu_custom_call.1} parent=79 // pred_check_branch
          %1605 = sbr.rel (%p1603) target = $region104
        $region103: #{tpu_custom_call.1} parent=79 // pred_region
          %1606 = dma.done [#allocation4], 256
        $region104: #{tpu_custom_call.1} parent=79 // pred_fallthru
          _
      $region80: #{tpu_custom_call.1} parent=5 // pred_fallthru
        _
      %p1607 = scmp.le.s32.totalorder 2, %s28
      // Predicated region
      $region105: #{tpu_custom_call.1} parent=5 // pred_check
        %p1608 = pneg %p1607
      $region106: #{tpu_custom_call.1} parent=5 // pred_check_branch
        %1610 = sbr.rel (%p1608) target = $region108
      $region107: #{tpu_custom_call.1} parent=5 // pred_region
        %s1611 = ssub.s32 %s28, 2
      $region108: #{tpu_custom_call.1} parent=5 // pred_fallthru
        _
    $region6: #{tpu_custom_call.1} parent=1 // loop_footer
      %s32 = sadd.s32 1, %s28
    $region7: #{tpu_custom_call.1} parent=1 // loop_footer_branch
      %27 = sbr.rel target = $region3
    $region8: #{tpu_custom_call.1} parent=1 // loop_exit
      _
    %1612 = vsyncpa [#allocation3], 1
    %s1613 = scalar_lea.sflag [#allocation3], 1
    %1614 = vsyncpa %s1613, 1
    %1615 = vsyncpa [#allocation6], 1
    %s1616 = scalar_lea.sflag [#allocation6], 1
    %1617 = vsyncpa %s1616, 1
    %1618 = vsyncpa [#allocation4], 1
    %s1619 = scalar_lea.sflag [#allocation4], 1
    %1620 = vsyncpa %s1619, 1

</llo_original>
